<compile_context>
chip_gen: v6e
topology: v6e:2x2x1
jax: 0.10.0
libtpu: 0.0.40
codegen_flags: <defaults>
</compile_context>

<pallas_src>
import jax
import jax.numpy as jnp
from jax import lax
from jax.experimental import pallas as pl
from jax.experimental.pallas import tpu as pltpu


# ----------------------------------------------------------------------------
# Fused kernel: interpolation + concat + MLP (Conv1d k=1, folded BN, ReLU)
# ----------------------------------------------------------------------------
def _make_fp_kernel(num_layers, has_points1, k_nn, idx_bits):
    """Build the fused interpolate + concat + MLP kernel body."""

    def kernel(*refs):
        i = 0
        xyz1_ref = refs[i]; i += 1          # (1, C, TN)  f32, channel-first
        xyz2_ref = refs[i]; i += 1          # (1, S, C)   f32, channel-last (tiny)
        p2_ref = refs[i]; i += 1            # (1, D2, S)  bf16, channel-first
        p1_ref = None
        if has_points1:
            p1_ref = refs[i]; i += 1        # (1, D1, TN) f32, channel-first
        w_refs = refs[i:-1]
        out_ref = refs[-1]                  # (1, Cout, TN) f32

        x1 = xyz1_ref[0]                    # (C, TN)
        x2 = xyz2_ref[0]                    # (S, C)
        C = x1.shape[0]
        S = x2.shape[0]
        TN = x1.shape[1]

        # Squared distances (S, TN) via per-channel squared differences on the
        # VPU.  Initialised from channel 0 -> no zero-fill pass; d >= 0 by
        # construction (needed for the bit-packing trick below).
        diff = x2[:, 0:1] - x1[0:1, :]
        d = diff * diff
        for c in range(1, C):
            diff = x2[:, c:c + 1] - x1[c:c + 1, :]
            d = d + diff * diff

        # Fused min/argmin 3-NN selection: pack the row index into the low
        # `idx_bits` mantissa bits of the distance.  For non-negative finite
        # f32, bit-pattern order == value order, so ONE float min reduction
        # yields both the min distance (high bits) and its row (low bits);
        # ties resolve to the smallest index, matching torch.sort.
        # (idx_bits <= 23, i.e. S <= 2^23; perturbs d by <= 2^-(23-idx_bits).)
        keep_mask = jnp.int32(-(1 << idx_bits))          # ~((1<<idx_bits)-1)
        idx_mask = jnp.int32((1 << idx_bits) - 1)
        iota_s = lax.broadcasted_iota(jnp.int32, (S, TN), 0)
        packed = pltpu.bitcast(
            (pltpu.bitcast(d, jnp.int32) & keep_mask) | iota_s, jnp.float32)
        big = jnp.float32(3e38)

        w_mat = None                                      # (S, TN) k-sparse weights
        w_sum = None                                      # (1, TN)
        for kk in range(k_nn):
            pmin = jnp.min(packed, axis=0, keepdims=True)            # (1, TN)
            pmin_i = pltpu.bitcast(pmin, jnp.int32)
            idxmin = pmin_i & idx_mask                                # (1, TN)
            dmin = pltpu.bitcast(pmin_i & keep_mask, jnp.float32)     # (1, TN)
            w = pl.reciprocal(dmin + 1e-8, approx=True)               # EUP slot
            onehot = iota_s == idxmin                                 # (S, TN)
            contrib = jnp.where(onehot, w, 0.0)
            w_mat = contrib if kk == 0 else w_mat + contrib
            w_sum = w if kk == 0 else w_sum + w
            if kk + 1 < k_nn:
                packed = jnp.where(onehot, big, packed)               # mask out

        # Interpolated features, channel-first (D2, TN): bf16 MXU matmul with
        # f32 accumulation; the per-query 1/sum normalization is applied after
        # the matmul (cheaper: (D2,TN)) on the EUP.
        interp = (jnp.dot(p2_ref[0], w_mat.astype(jnp.bfloat16),
                          preferred_element_type=jnp.float32)
                  * pl.reciprocal(w_sum, approx=True))

        if num_layers == 0:
            if has_points1:
                out_ref[0] = jnp.concatenate([p1_ref[0], interp], axis=0)
            else:
                out_ref[0] = interp
            return

        # First conv layer: the concat(points1, interp) is folded in by
        # splitting the (bf16) weight into its points1 / interp halves.
        if has_points1:
            w0a = w_refs[0][...]            # (C0, D1) bf16
            w0b = w_refs[1][...]            # (C0, D2) bf16
            b0 = w_refs[2][...]             # (C0, 1)  f32
            rest = w_refs[3:]
            y = (jnp.dot(w0a, p1_ref[0].astype(jnp.bfloat16),
                         preferred_element_type=jnp.float32)
                 + jnp.dot(w0b, interp.astype(jnp.bfloat16),
                           preferred_element_type=jnp.float32)
                 + b0)
        else:
            w0 = w_refs[0][...]             # (C0, D2) bf16
            b0 = w_refs[1][...]             # (C0, 1)  f32
            rest = w_refs[2:]
            y = jnp.dot(w0, interp.astype(jnp.bfloat16),
                        preferred_element_type=jnp.float32) + b0
        y = jnp.maximum(y, 0.0)

        # Remaining conv+BN+ReLU layers, fused: activation stays in VMEM.
        for li in range(num_layers - 1):
            w = rest[2 * li][...]           # bf16
            b = rest[2 * li + 1][...]       # f32
            y = jnp.dot(w, y.astype(jnp.bfloat16),
                        preferred_element_type=jnp.float32) + b
            y = jnp.maximum(y, 0.0)

        out_ref[0] = y

    return kernel


# ----------------------------------------------------------------------------
# Tiling / VMEM sizing helpers (generation-aware)
# ----------------------------------------------------------------------------
def _vmem_capacity_bytes():
    try:
        return int(pltpu.get_tpu_info().vmem_capacity_bytes)
    except Exception:
        # Unknown part: assume the smallest VMEM (v7x, 64 MiB) -> always safe.
        return 64 * 1024 * 1024


def _vmem_budgets():
    cap = _vmem_capacity_bytes()
    if cap >= 96 * 1024 * 1024:                     # v5e / v6e: 128 MiB VMEM
        return 44 * 1024 * 1024, 100 * 1024 * 1024
    return 20 * 1024 * 1024, 56 * 1024 * 1024       # v7x: 64 MiB VMEM


def _choose_tile_n(n_pad, s, batch, tile_budget):
    """Largest lane tile (multiple of 128, divides padded N) whose (S, TN)
    temporaries fit the per-generation budget, then split further until the
    grid has >= 4 total steps so both v7x TensorCores get work."""
    tn = 128
    for cand in (2048, 1024, 512, 256, 128):
        if n_pad % cand == 0 and 6 * s * cand * 4 <= tile_budget:
            tn = cand
            break
    while batch * (n_pad // tn) < 4 and tn > 128:
        tn //= 2
    return tn


def _vmem_limit_bytes(tn, s, c, d1, d2, layer_dims, cap_bytes):
    f32, bf16 = 4, 2
    cout_last = layer_dims[-1] if layer_dims else (d1 + d2)
    # double-buffered streamed tiles + output tile
    io = 2 * (f32 * (c * tn + d1 * tn + s * c + cout_last * tn) + bf16 * d2 * s)
    # resident weights (bf16) + biases (f32)
    wts, cin = 0, d1 + d2
    for co in layer_dims:
        wts += bf16 * co * cin + f32 * co
        cin = co
    # live kernel temporaries: ~ a few (S, TN) f32 tensors + activations
    tmp = 6 * f32 * s * tn + 4 * f32 * max([d1 + d2] + list(layer_dims)) * tn
    total = int(1.5 * (io + wts + tmp)) + (1 << 20)
    return max(min(total, cap_bytes), 16 * 1024 * 1024)


# ----------------------------------------------------------------------------
# Module wrapper
# ----------------------------------------------------------------------------
def init_params(key, in_channel, mlp):
    params = []
    last = in_channel
    for out in mlp:
        key, k1, k2, k3, k4 = jax.random.split(key, 5)
        params.append(dict(
            w=0.1 * jax.random.normal(k1, (out, last), jnp.float32),
            b=0.1 * jax.random.normal(k2, (out,), jnp.float32),
            gamma=1.0 + 0.1 * jax.random.normal(k3, (out,), jnp.float32),
            beta=0.1 * jax.random.normal(k4, (out,), jnp.float32),
            mean=jnp.zeros((out,), jnp.float32),
            var=jnp.ones((out,), jnp.float32),
        ))
        last = out
    return params


def feature_propagation(xyz1, xyz2, points1, points2, params):
    """xyz1 [B,C,N], xyz2 [B,C,S], points1 [B,D1,N] or None, points2 [B,D2,S].

    Returns [B, mlp[-1], N] (channel-first, like the PyTorch module).
    """
    xyz1 = xyz1.astype(jnp.float32)
    xyz2_t = jnp.transpose(xyz2, (0, 2, 1)).astype(jnp.float32)   # (B,S,C) tiny
    points2 = points2.astype(jnp.bfloat16)                        # MXU operand only
    B, C, N = xyz1.shape
    S = xyz2_t.shape[1]
    D2 = points2.shape[1]
    has_points1 = points1 is not None
    D1 = points1.shape[1] if has_points1 else 0

    # Pad N up to a multiple of 128: lane-dense (unmasked) stores and legal
    # tiles for any N.  Padded query columns are computed but sliced off.
    n_pad = ((N + 127) // 128) * 128
    if n_pad != N:
        xyz1 = jnp.pad(xyz1, ((0, 0), (0, 0), (0, n_pad - N)))
    if has_points1:
        points1 = points1.astype(jnp.float32)
        if n_pad != N:
            points1 = jnp.pad(points1, ((0, 0), (0, 0), (0, n_pad - N)))

    # Fold eval-mode BatchNorm into the 1x1 conv weights / bias.  Weights go
    # to bf16 (MXU-native, half the VMEM); biases stay f32.
    eps = 1e-5
    num_layers = len(params)
    weight_args, weight_shapes, layer_dims = [], [], []
    for li, layer in enumerate(params):
        scale = layer["gamma"] / jnp.sqrt(layer["var"] + eps)
        w_eff = (scale[:, None] * layer["w"]).astype(jnp.float32)
        b_eff = (scale * (layer["b"] - layer["mean"])
                 + layer["beta"]).astype(jnp.float32)
        cout, cin = w_eff.shape
        layer_dims.append(cout)
        if li == 0 and has_points1:
            # split first-layer weight so the concat happens on the MXU
            weight_args += [w_eff[:, :D1].astype(jnp.bfloat16),
                            w_eff[:, D1:].astype(jnp.bfloat16),
                            b_eff[:, None]]
            weight_shapes += [(cout, D1), (cout, D2), (cout, 1)]
        else:
            weight_args += [w_eff.astype(jnp.bfloat16), b_eff[:, None]]
            weight_shapes += [(cout, cin), (cout, 1)]
    cout_last = layer_dims[-1] if num_layers else (D1 + D2)

    tile_budget, vmem_cap = _vmem_budgets()
    TN = _choose_tile_n(n_pad, S, B, tile_budget)
    n_tiles = n_pad // TN

    in_args = [xyz1, xyz2_t, points2]
    base_specs = [
        pl.BlockSpec((1, C, TN), lambda b, n: (b, 0, n)),
        pl.BlockSpec((1, S, C), lambda b, n: (b, 0, 0)),
        pl.BlockSpec((1, D2, S), lambda b, n: (b, 0, 0)),
    ]
    if has_points1:
        in_args.append(points1)
        base_specs.append(pl.BlockSpec((1, D1, TN), lambda b, n: (b, 0, n)))
    in_args += weight_args

    idx_bits = max(1, (S - 1).bit_length())
    kernel = _make_fp_kernel(num_layers, has_points1, min(3, S), idx_bits)
    limit = _vmem_limit_bytes(TN, S, C, D1, D2, layer_dims, vmem_cap)

    def run(weight_mode):
        wkw = {} if weight_mode is None else {"pipeline_mode": weight_mode}
        weight_specs = [pl.BlockSpec(shape, lambda b, n: (0, 0), **wkw)
                        for shape in weight_shapes]
        return pl.pallas_call(
            kernel,
            out_shape=jax.ShapeDtypeStruct((B, cout_last, n_pad), jnp.float32),
            grid_spec=pltpu.PrefetchScalarGridSpec(
                num_scalar_prefetch=0,
                grid=(B, n_tiles),
                in_specs=base_specs + weight_specs,
                out_specs=pl.BlockSpec((1, cout_last, TN),
                                       lambda b, n: (b, 0, n)),
            ),
            compiler_params=pltpu.CompilerParams(
                dimension_semantics=("parallel", "parallel"),
                vmem_limit_bytes=limit),
        )(*in_args)

    try:
        # Weights never change across the grid -> single-buffer them (reclaims
        # the redundant double-buffer copy of every folded conv weight).
        out = run(pl.Buffered(1))
    except Exception:
        # Fallback if single-buffered constant blocks are rejected here.
        out = run(None)

    return out[:, :, :N]


# ----------------------------------------------------------------------------
# Pure-JAX reference (PyTorch semantics, f32, for correctness check)
# ----------------------------------------------------------------------------
def reference(xyz1, xyz2, points1, points2, params):
    xyz1_t = jnp.transpose(xyz1, (0, 2, 1))
    xyz2_t = jnp.transpose(xyz2, (0, 2, 1))
    p2_t = jnp.transpose(points2, (0, 2, 1))
    dist = (-2.0 * jnp.einsum('bnc,bsc->bns', xyz1_t, xyz2_t)
            + jnp.sum(xyz1_t ** 2, -1)[:, :, None]
            + jnp.sum(xyz2_t ** 2, -1)[:, None, :])
    idx = jnp.argsort(dist, axis=-1)[:, :, :3]
    d3 = jnp.take_along_axis(dist, idx, axis=-1)
    recip = 1.0 / (d3 + 1e-8)
    wgt = recip / jnp.sum(recip, -1, keepdims=True)
    gathered = jax.vmap(lambda pts, ind: pts[ind])(p2_t, idx)   # (B,N,3,D2)
    interp = jnp.sum(gathered * wgt[..., None], axis=2)
    p1_t = jnp.transpose(points1, (0, 2, 1))
    x = jnp.transpose(jnp.concatenate([p1_t, interp], -1), (0, 2, 1))
    eps = 1e-5
    for layer in params:
        scale = layer["gamma"] / jnp.sqrt(layer["var"] + eps)
        w_eff = scale[:, None] * layer["w"]
        b_eff = scale * (layer["b"] - layer["mean"]) + layer["beta"]
        x = jnp.maximum(jnp.einsum('oc,bcn->bon', w_eff, x)
                        + b_eff[None, :, None], 0.0)
    return x


if __name__ == "__main__":
    key = jax.random.PRNGKey(0)
    B, C, N, S, D1, D2 = 2, 3, 64, 16, 4, 8
    mlp = [32, 16]
    in_channel = D1 + D2

    k1, k2, k3, k4, kp = jax.random.split(key, 5)
    xyz1 = jax.random.normal(k1, (B, C, N), jnp.float32)
    xyz2 = jax.random.normal(k2, (B, C, S), jnp.float32)
    points1 = jax.random.normal(k3, (B, D1, N), jnp.float32)
    points2 = jax.random.normal(k4, (B, D2, S), jnp.float32)
    params = init_params(kp, in_channel, mlp)

    out = feature_propagation(xyz1, xyz2, points1, points2, params)
    out = jax.block_until_ready(out)
    assert out.shape == (B, mlp[-1], N), out.shape

    ref = jax.block_until_ready(reference(xyz1, xyz2, points1, points2, params))
    # Tolerance reflects the intentional fast-math choices: bf16 MXU matmuls
    # (f32 accumulation), EUP approx reciprocals, and the index-packed min
    # (clears the low idx_bits mantissa bits of the distance).
    assert jnp.allclose(out, ref, rtol=2e-2, atol=2e-2), \
        float(jnp.max(jnp.abs(out - ref)))

    print("KERNEL_OK")
</pallas_src>

<mosaic_0001>
module attributes {stable_mosaic.version = 11 : i64} {
  func.func @kernel(%arg0: i32, %arg1: i32, %arg2: memref<1x3x128xf32, #tpu.memory_space<vmem>>, %arg3: memref<1x16x3xf32, #tpu.memory_space<vmem>>, %arg4: memref<1x8x16xbf16, #tpu.memory_space<vmem>>, %arg5: memref<1x4x128xf32, #tpu.memory_space<vmem>>, %arg6: memref<32x4xbf16, #tpu.memory_space<vmem>>, %arg7: memref<32x8xbf16, #tpu.memory_space<vmem>>, %arg8: memref<32x1xf32, #tpu.memory_space<vmem>>, %arg9: memref<16x32xbf16, #tpu.memory_space<vmem>>, %arg10: memref<16x1xf32, #tpu.memory_space<vmem>>, %arg11: memref<1x16x128xf32, #tpu.memory_space<vmem>>) attributes {dimension_semantics = [#tpu.dimension_semantics<parallel>, #tpu.dimension_semantics<parallel>], iteration_bounds = array<i64: 2, 1>, scalar_prefetch = 0 : i64, scratch_operands = 0 : i64, tpu.core_type = #tpu.core_type<tc>, window_params = [{transform_indices = @transform_0, window_bounds = array<i64: 1, 3, 128>}, {transform_indices = @transform_1, window_bounds = array<i64: 1, 16, 3>}, {transform_indices = @transform_2, window_bounds = array<i64: 1, 8, 16>}, {transform_indices = @transform_3, window_bounds = array<i64: 1, 4, 128>}, {pipeline_mode = #tpu.pipeline_mode<synchronous>, transform_indices = @transform_4, window_bounds = array<i64: 32, 4>}, {pipeline_mode = #tpu.pipeline_mode<synchronous>, transform_indices = @transform_5, window_bounds = array<i64: 32, 8>}, {pipeline_mode = #tpu.pipeline_mode<synchronous>, transform_indices = @transform_6, window_bounds = array<i64: 32, 1>}, {pipeline_mode = #tpu.pipeline_mode<synchronous>, transform_indices = @transform_7, window_bounds = array<i64: 16, 32>}, {pipeline_mode = #tpu.pipeline_mode<synchronous>, transform_indices = @transform_8, window_bounds = array<i64: 16, 1>}, {transform_indices = @transform_9, window_bounds = array<i64: 1, 16, 128>}]} {
    %c0 = arith.constant 0 : index
    %c0_0 = arith.constant 0 : index
    %c0_1 = arith.constant 0 : index
    %0 = vector.load %arg2[%c0, %c0_0, %c0_1] : memref<1x3x128xf32, #tpu.memory_space<vmem>>, vector<1x3x128xf32>
    %1 = vector.shape_cast %0 : vector<1x3x128xf32> to vector<3x128xf32>
    %c0_2 = arith.constant 0 : index
    %c0_3 = arith.constant 0 : index
    %c0_4 = arith.constant 0 : index
    %2 = vector.load %arg3[%c0_2, %c0_3, %c0_4] : memref<1x16x3xf32, #tpu.memory_space<vmem>>, vector<1x16x3xf32>
    %3 = vector.shape_cast %2 : vector<1x16x3xf32> to vector<16x3xf32>
    %4 = vector.extract_strided_slice %3 {offsets = [0, 0], sizes = [16, 1], strides = [1, 1]} : vector<16x3xf32> to vector<16x1xf32>
    %5 = vector.extract_strided_slice %1 {offsets = [0, 0], sizes = [1, 128], strides = [1, 1]} : vector<3x128xf32> to vector<1x128xf32>
    %6 = vector.broadcast %4 : vector<16x1xf32> to vector<16x128xf32>
    %7 = vector.broadcast %5 : vector<1x128xf32> to vector<16x128xf32>
    %8 = arith.subf %6, %7 : vector<16x128xf32>
    %9 = arith.mulf %8, %8 : vector<16x128xf32>
    %10 = vector.extract_strided_slice %3 {offsets = [0, 1], sizes = [16, 1], strides = [1, 1]} : vector<16x3xf32> to vector<16x1xf32>
    %11 = vector.extract_strided_slice %1 {offsets = [1, 0], sizes = [1, 128], strides = [1, 1]} : vector<3x128xf32> to vector<1x128xf32>
    %12 = vector.broadcast %10 : vector<16x1xf32> to vector<16x128xf32>
    %13 = vector.broadcast %11 : vector<1x128xf32> to vector<16x128xf32>
    %14 = arith.subf %12, %13 : vector<16x128xf32>
    %15 = arith.mulf %14, %14 : vector<16x128xf32>
    %16 = arith.addf %9, %15 : vector<16x128xf32>
    %17 = vector.extract_strided_slice %3 {offsets = [0, 2], sizes = [16, 1], strides = [1, 1]} : vector<16x3xf32> to vector<16x1xf32>
    %18 = vector.extract_strided_slice %1 {offsets = [2, 0], sizes = [1, 128], strides = [1, 1]} : vector<3x128xf32> to vector<1x128xf32>
    %19 = vector.broadcast %17 : vector<16x1xf32> to vector<16x128xf32>
    %20 = vector.broadcast %18 : vector<1x128xf32> to vector<16x128xf32>
    %21 = arith.subf %19, %20 : vector<16x128xf32>
    %22 = arith.mulf %21, %21 : vector<16x128xf32>
    %23 = arith.addf %16, %22 : vector<16x128xf32>
    %24 = tpu.iota {dimensions = array<i32: 0>} : vector<16x128xi32>
    %25 = tpu.bitcast %23 : vector<16x128xf32> -> vector<16x128xi32>
    %c-16_i32 = arith.constant -16 : i32
    %26 = vector.broadcast %c-16_i32 : i32 to vector<16x128xi32>
    %27 = arith.andi %25, %26 : vector<16x128xi32>
    %28 = arith.ori %27, %24 : vector<16x128xi32>
    %29 = tpu.bitcast %28 : vector<16x128xi32> -> vector<16x128xf32>
    %cst = arith.constant dense<0x7F800000> : vector<128xf32>
    %30 = vector.multi_reduction <minimumf>, %29, %cst [0] : vector<16x128xf32> to vector<128xf32>
    %31 = vector.shape_cast %30 : vector<128xf32> to vector<1x128xf32>
    %32 = tpu.bitcast %31 : vector<1x128xf32> -> vector<1x128xi32>
    %c15_i32 = arith.constant 15 : i32
    %33 = vector.broadcast %c15_i32 : i32 to vector<1x128xi32>
    %34 = arith.andi %32, %33 : vector<1x128xi32>
    %c-16_i32_5 = arith.constant -16 : i32
    %35 = vector.broadcast %c-16_i32_5 : i32 to vector<1x128xi32>
    %36 = arith.andi %32, %35 : vector<1x128xi32>
    %37 = tpu.bitcast %36 : vector<1x128xi32> -> vector<1x128xf32>
    %cst_6 = arith.constant 9.99999993E-9 : f32
    %38 = vector.broadcast %cst_6 : f32 to vector<1x128xf32>
    %39 = arith.addf %37, %38 : vector<1x128xf32>
    %40 = tpu.reciprocal %39 {approx = true} : vector<1x128xf32> -> vector<1x128xf32>
    %41 = vector.broadcast %34 : vector<1x128xi32> to vector<16x128xi32>
    %42 = arith.cmpi eq, %24, %41 : vector<16x128xi32>
    %cst_7 = arith.constant 0.000000e+00 : f32
    %43 = vector.shape_cast %40 : vector<1x128xf32> to vector<1x128xf32>
    %44 = vector.broadcast %43 : vector<1x128xf32> to vector<16x128xf32>
    %45 = vector.broadcast %cst_7 : f32 to vector<16x128xf32>
    %46 = arith.select %42, %44, %45 : vector<16x128xi1>, vector<16x128xf32>
    %cst_8 = arith.constant 3.000000e+38 : f32
    %47 = vector.broadcast %cst_8 : f32 to vector<16x128xf32>
    %48 = arith.select %42, %47, %29 : vector<16x128xi1>, vector<16x128xf32>
    %cst_9 = arith.constant dense<0x7F800000> : vector<128xf32>
    %49 = vector.multi_reduction <minimumf>, %48, %cst_9 [0] : vector<16x128xf32> to vector<128xf32>
    %50 = vector.shape_cast %49 : vector<128xf32> to vector<1x128xf32>
    %51 = tpu.bitcast %50 : vector<1x128xf32> -> vector<1x128xi32>
    %c15_i32_10 = arith.constant 15 : i32
    %52 = vector.broadcast %c15_i32_10 : i32 to vector<1x128xi32>
    %53 = arith.andi %51, %52 : vector<1x128xi32>
    %c-16_i32_11 = arith.constant -16 : i32
    %54 = vector.broadcast %c-16_i32_11 : i32 to vector<1x128xi32>
    %55 = arith.andi %51, %54 : vector<1x128xi32>
    %56 = tpu.bitcast %55 : vector<1x128xi32> -> vector<1x128xf32>
    %cst_12 = arith.constant 9.99999993E-9 : f32
    %57 = vector.broadcast %cst_12 : f32 to vector<1x128xf32>
    %58 = arith.addf %56, %57 : vector<1x128xf32>
    %59 = tpu.reciprocal %58 {approx = true} : vector<1x128xf32> -> vector<1x128xf32>
    %60 = vector.broadcast %53 : vector<1x128xi32> to vector<16x128xi32>
    %61 = arith.cmpi eq, %24, %60 : vector<16x128xi32>
    %cst_13 = arith.constant 0.000000e+00 : f32
    %62 = vector.shape_cast %59 : vector<1x128xf32> to vector<1x128xf32>
    %63 = vector.broadcast %62 : vector<1x128xf32> to vector<16x128xf32>
    %64 = vector.broadcast %cst_13 : f32 to vector<16x128xf32>
    %65 = arith.select %61, %63, %64 : vector<16x128xi1>, vector<16x128xf32>
    %66 = arith.addf %46, %65 : vector<16x128xf32>
    %67 = arith.addf %40, %59 : vector<1x128xf32>
    %cst_14 = arith.constant 3.000000e+38 : f32
    %68 = vector.broadcast %cst_14 : f32 to vector<16x128xf32>
    %69 = arith.select %61, %68, %48 : vector<16x128xi1>, vector<16x128xf32>
    %cst_15 = arith.constant dense<0x7F800000> : vector<128xf32>
    %70 = vector.multi_reduction <minimumf>, %69, %cst_15 [0] : vector<16x128xf32> to vector<128xf32>
    %71 = vector.shape_cast %70 : vector<128xf32> to vector<1x128xf32>
    %72 = tpu.bitcast %71 : vector<1x128xf32> -> vector<1x128xi32>
    %c15_i32_16 = arith.constant 15 : i32
    %73 = vector.broadcast %c15_i32_16 : i32 to vector<1x128xi32>
    %74 = arith.andi %72, %73 : vector<1x128xi32>
    %c-16_i32_17 = arith.constant -16 : i32
    %75 = vector.broadcast %c-16_i32_17 : i32 to vector<1x128xi32>
    %76 = arith.andi %72, %75 : vector<1x128xi32>
    %77 = tpu.bitcast %76 : vector<1x128xi32> -> vector<1x128xf32>
    %cst_18 = arith.constant 9.99999993E-9 : f32
    %78 = vector.broadcast %cst_18 : f32 to vector<1x128xf32>
    %79 = arith.addf %77, %78 : vector<1x128xf32>
    %80 = tpu.reciprocal %79 {approx = true} : vector<1x128xf32> -> vector<1x128xf32>
    %81 = vector.broadcast %74 : vector<1x128xi32> to vector<16x128xi32>
    %82 = arith.cmpi eq, %24, %81 : vector<16x128xi32>
    %cst_19 = arith.constant 0.000000e+00 : f32
    %83 = vector.shape_cast %80 : vector<1x128xf32> to vector<1x128xf32>
    %84 = vector.broadcast %83 : vector<1x128xf32> to vector<16x128xf32>
    %85 = vector.broadcast %cst_19 : f32 to vector<16x128xf32>
    %86 = arith.select %82, %84, %85 : vector<16x128xi1>, vector<16x128xf32>
    %87 = arith.addf %66, %86 : vector<16x128xf32>
    %88 = arith.addf %67, %80 : vector<1x128xf32>
    %c0_20 = arith.constant 0 : index
    %c0_21 = arith.constant 0 : index
    %c0_22 = arith.constant 0 : index
    %89 = vector.load %arg4[%c0_20, %c0_21, %c0_22] : memref<1x8x16xbf16, #tpu.memory_space<vmem>>, vector<1x8x16xbf16>
    %90 = vector.shape_cast %89 : vector<1x8x16xbf16> to vector<8x16xbf16>
    %91 = arith.truncf %87 : vector<16x128xf32> to vector<16x128xbf16>
    %cst_23 = arith.constant dense<0.000000e+00> : vector<8x128xf32>
    %92 = tpu.matmul %90, %91, %cst_23 {dimension_numbers = #tpu.dot_dimension_numbers<[1], [0], [0], [1], [0, 0, 1, 1], [], []>} : vector<8x16xbf16>, vector<16x128xbf16>, vector<8x128xf32> -> vector<8x128xf32>
    %93 = tpu.reciprocal %88 {approx = true} : vector<1x128xf32> -> vector<1x128xf32>
    %94 = vector.broadcast %93 : vector<1x128xf32> to vector<8x128xf32>
    %95 = arith.mulf %92, %94 : vector<8x128xf32>
    %c0_24 = arith.constant 0 : index
    %c0_25 = arith.constant 0 : index
    %96 = vector.load %arg6[%c0_24, %c0_25] : memref<32x4xbf16, #tpu.memory_space<vmem>>, vector<32x4xbf16>
    %c0_26 = arith.constant 0 : index
    %c0_27 = arith.constant 0 : index
    %97 = vector.load %arg7[%c0_26, %c0_27] : memref<32x8xbf16, #tpu.memory_space<vmem>>, vector<32x8xbf16>
    %c0_28 = arith.constant 0 : index
    %c0_29 = arith.constant 0 : index
    %98 = vector.load %arg8[%c0_28, %c0_29] : memref<32x1xf32, #tpu.memory_space<vmem>>, vector<32x1xf32>
    %c0_30 = arith.constant 0 : index
    %c0_31 = arith.constant 0 : index
    %c0_32 = arith.constant 0 : index
    %99 = vector.load %arg5[%c0_30, %c0_31, %c0_32] : memref<1x4x128xf32, #tpu.memory_space<vmem>>, vector<1x4x128xf32>
    %100 = vector.shape_cast %99 : vector<1x4x128xf32> to vector<4x128xf32>
    %101 = arith.truncf %100 : vector<4x128xf32> to vector<4x128xbf16>
    %cst_33 = arith.constant dense<0.000000e+00> : vector<32x128xf32>
    %102 = tpu.matmul %96, %101, %cst_33 {dimension_numbers = #tpu.dot_dimension_numbers<[1], [0], [0], [1], [0, 0, 1, 1], [], []>} : vector<32x4xbf16>, vector<4x128xbf16>, vector<32x128xf32> -> vector<32x128xf32>
    %103 = arith.truncf %95 : vector<8x128xf32> to vector<8x128xbf16>
    %cst_34 = arith.constant dense<0.000000e+00> : vector<32x128xf32>
    %104 = tpu.matmul %97, %103, %cst_34 {dimension_numbers = #tpu.dot_dimension_numbers<[1], [0], [0], [1], [0, 0, 1, 1], [], []>} : vector<32x8xbf16>, vector<8x128xbf16>, vector<32x128xf32> -> vector<32x128xf32>
    %105 = arith.addf %102, %104 : vector<32x128xf32>
    %106 = vector.broadcast %98 : vector<32x1xf32> to vector<32x128xf32>
    %107 = arith.addf %105, %106 : vector<32x128xf32>
    %cst_35 = arith.constant 0.000000e+00 : f32
    %108 = vector.broadcast %cst_35 : f32 to vector<32x128xf32>
    %109 = arith.maximumf %107, %108 : vector<32x128xf32>
    %c0_36 = arith.constant 0 : index
    %c0_37 = arith.constant 0 : index
    %110 = vector.load %arg9[%c0_36, %c0_37] : memref<16x32xbf16, #tpu.memory_space<vmem>>, vector<16x32xbf16>
    %c0_38 = arith.constant 0 : index
    %c0_39 = arith.constant 0 : index
    %111 = vector.load %arg10[%c0_38, %c0_39] : memref<16x1xf32, #tpu.memory_space<vmem>>, vector<16x1xf32>
    %112 = arith.truncf %109 : vector<32x128xf32> to vector<32x128xbf16>
    %cst_40 = arith.constant dense<0.000000e+00> : vector<16x128xf32>
    %113 = tpu.matmul %110, %112, %cst_40 {dimension_numbers = #tpu.dot_dimension_numbers<[1], [0], [0], [1], [0, 0, 1, 1], [], []>} : vector<16x32xbf16>, vector<32x128xbf16>, vector<16x128xf32> -> vector<16x128xf32>
    %114 = vector.broadcast %111 : vector<16x1xf32> to vector<16x128xf32>
    %115 = arith.addf %113, %114 : vector<16x128xf32>
    %cst_41 = arith.constant 0.000000e+00 : f32
    %116 = vector.broadcast %cst_41 : f32 to vector<16x128xf32>
    %117 = arith.maximumf %115, %116 : vector<16x128xf32>
    %c0_42 = arith.constant 0 : index
    %c0_43 = arith.constant 0 : index
    %c0_44 = arith.constant 0 : index
    %118 = vector.load %arg11[%c0_42, %c0_43, %c0_44] : memref<1x16x128xf32, #tpu.memory_space<vmem>>, vector<1x16x128xf32>
    %119 = vector.shape_cast %118 : vector<1x16x128xf32> to vector<16x128xf32>
    %120 = vector.shape_cast %117 : vector<16x128xf32> to vector<1x16x128xf32>
    tpu.vector_store %arg11[%c0_42, %c0_43, %c0_44], %120 {strides = array<i32>} : memref<1x16x128xf32, #tpu.memory_space<vmem>>, vector<1x16x128xf32>,
    return
  }
  func.func @transform_0(%arg0: i32, %arg1: i32) -> (i32, i32, i32) {
    %c0_i32 = arith.constant 0 : i32
    %c0_i32_0 = arith.constant 0 : i32
    return %arg0, %c0_i32, %arg1 : i32, i32, i32
  }
  func.func @transform_1(%arg0: i32, %arg1: i32) -> (i32, i32, i32) {
    %c0_i32 = arith.constant 0 : i32
    %c0_i32_0 = arith.constant 0 : i32
    %c0_i32_1 = arith.constant 0 : i32
    return %arg0, %c0_i32, %c0_i32_0 : i32, i32, i32
  }
  func.func @transform_2(%arg0: i32, %arg1: i32) -> (i32, i32, i32) {
    %c0_i32 = arith.constant 0 : i32
    %c0_i32_0 = arith.constant 0 : i32
    %c0_i32_1 = arith.constant 0 : i32
    return %arg0, %c0_i32, %c0_i32_0 : i32, i32, i32
  }
  func.func @transform_3(%arg0: i32, %arg1: i32) -> (i32, i32, i32) {
    %c0_i32 = arith.constant 0 : i32
    %c0_i32_0 = arith.constant 0 : i32
    return %arg0, %c0_i32, %arg1 : i32, i32, i32
  }
  func.func @transform_4(%arg0: i32, %arg1: i32) -> (i32, i32) {
    %c0_i32 = arith.constant 0 : i32
    %c0_i32_0 = arith.constant 0 : i32
    %c0_i32_1 = arith.constant 0 : i32
    return %c0_i32, %c0_i32_0 : i32, i32
  }
  func.func @transform_5(%arg0: i32, %arg1: i32) -> (i32, i32) {
    %c0_i32 = arith.constant 0 : i32
    %c0_i32_0 = arith.constant 0 : i32
    %c0_i32_1 = arith.constant 0 : i32
    return %c0_i32, %c0_i32_0 : i32, i32
  }
  func.func @transform_6(%arg0: i32, %arg1: i32) -> (i32, i32) {
    %c0_i32 = arith.constant 0 : i32
    %c0_i32_0 = arith.constant 0 : i32
    %c0_i32_1 = arith.constant 0 : i32
    return %c0_i32, %c0_i32_0 : i32, i32
  }
  func.func @transform_7(%arg0: i32, %arg1: i32) -> (i32, i32) {
    %c0_i32 = arith.constant 0 : i32
    %c0_i32_0 = arith.constant 0 : i32
    %c0_i32_1 = arith.constant 0 : i32
    return %c0_i32, %c0_i32_0 : i32, i32
  }
  func.func @transform_8(%arg0: i32, %arg1: i32) -> (i32, i32) {
    %c0_i32 = arith.constant 0 : i32
    %c0_i32_0 = arith.constant 0 : i32
    %c0_i32_1 = arith.constant 0 : i32
    return %c0_i32, %c0_i32_0 : i32, i32
  }
  func.func @transform_9(%arg0: i32, %arg1: i32) -> (i32, i32, i32) {
    %c0_i32 = arith.constant 0 : i32
    %c0_i32_0 = arith.constant 0 : i32
    return %arg0, %c0_i32, %arg1 : i32, i32, i32
  }
}

module attributes {stable_mosaic.version = 11 : i64} {
  func.func @kernel(%arg0: i32, %arg1: i32, %arg2: memref<1x3x128xf32, #tpu.memory_space<vmem>>, %arg3: memref<1x16x3xf32, #tpu.memory_space<vmem>>, %arg4: memref<1x8x16xbf16, #tpu.memory_space<vmem>>, %arg5: memref<1x4x128xf32, #tpu.memory_space<vmem>>, %arg6: memref<32x4xbf16, #tpu.memory_space<vmem>>, %arg7: memref<32x8xbf16, #tpu.memory_space<vmem>>, %arg8: memref<32x1xf32, #tpu.memory_space<vmem>>, %arg9: memref<16x32xbf16, #tpu.memory_space<vmem>>, %arg10: memref<16x1xf32, #tpu.memory_space<vmem>>, %arg11: memref<1x16x128xf32, #tpu.memory_space<vmem>>) attributes {dimension_semantics = [#tpu.dimension_semantics<parallel>, #tpu.dimension_semantics<parallel>], iteration_bounds = array<i64: 2, 1>, scalar_prefetch = 0 : i64, scratch_operands = 0 : i64, tpu.core_type = #tpu.core_type<tc>, window_params = [{transform_indices = @transform_0, window_bounds = array<i64: 1, 3, 128>}, {transform_indices = @transform_1, window_bounds = array<i64: 1, 16, 3>}, {transform_indices = @transform_2, window_bounds = array<i64: 1, 8, 16>}, {transform_indices = @transform_3, window_bounds = array<i64: 1, 4, 128>}, {pipeline_mode = #tpu.pipeline_mode<synchronous>, transform_indices = @transform_4, window_bounds = array<i64: 32, 4>}, {pipeline_mode = #tpu.pipeline_mode<synchronous>, transform_indices = @transform_5, window_bounds = array<i64: 32, 8>}, {pipeline_mode = #tpu.pipeline_mode<synchronous>, transform_indices = @transform_6, window_bounds = array<i64: 32, 1>}, {pipeline_mode = #tpu.pipeline_mode<synchronous>, transform_indices = @transform_7, window_bounds = array<i64: 16, 32>}, {pipeline_mode = #tpu.pipeline_mode<synchronous>, transform_indices = @transform_8, window_bounds = array<i64: 16, 1>}, {transform_indices = @transform_9, window_bounds = array<i64: 1, 16, 128>}]} {
    %c0 = arith.constant 0 : index
    %c0_0 = arith.constant 0 : index
    %c0_1 = arith.constant 0 : index
    %0 = vector.load %arg2[%c0, %c0_0, %c0_1] : memref<1x3x128xf32, #tpu.memory_space<vmem>>, vector<1x3x128xf32>
    %1 = vector.shape_cast %0 : vector<1x3x128xf32> to vector<3x128xf32>
    %c0_2 = arith.constant 0 : index
    %c0_3 = arith.constant 0 : index
    %c0_4 = arith.constant 0 : index
    %2 = vector.load %arg3[%c0_2, %c0_3, %c0_4] : memref<1x16x3xf32, #tpu.memory_space<vmem>>, vector<1x16x3xf32>
    %3 = vector.shape_cast %2 : vector<1x16x3xf32> to vector<16x3xf32>
    %4 = vector.extract_strided_slice %3 {offsets = [0, 0], sizes = [16, 1], strides = [1, 1]} : vector<16x3xf32> to vector<16x1xf32>
    %5 = vector.extract_strided_slice %1 {offsets = [0, 0], sizes = [1, 128], strides = [1, 1]} : vector<3x128xf32> to vector<1x128xf32>
    %6 = vector.broadcast %4 : vector<16x1xf32> to vector<16x128xf32>
    %7 = vector.broadcast %5 : vector<1x128xf32> to vector<16x128xf32>
    %8 = arith.subf %6, %7 : vector<16x128xf32>
    %9 = arith.mulf %8, %8 : vector<16x128xf32>
    %10 = vector.extract_strided_slice %3 {offsets = [0, 1], sizes = [16, 1], strides = [1, 1]} : vector<16x3xf32> to vector<16x1xf32>
    %11 = vector.extract_strided_slice %1 {offsets = [1, 0], sizes = [1, 128], strides = [1, 1]} : vector<3x128xf32> to vector<1x128xf32>
    %12 = vector.broadcast %10 : vector<16x1xf32> to vector<16x128xf32>
    %13 = vector.broadcast %11 : vector<1x128xf32> to vector<16x128xf32>
    %14 = arith.subf %12, %13 : vector<16x128xf32>
    %15 = arith.mulf %14, %14 : vector<16x128xf32>
    %16 = arith.addf %9, %15 : vector<16x128xf32>
    %17 = vector.extract_strided_slice %3 {offsets = [0, 2], sizes = [16, 1], strides = [1, 1]} : vector<16x3xf32> to vector<16x1xf32>
    %18 = vector.extract_strided_slice %1 {offsets = [2, 0], sizes = [1, 128], strides = [1, 1]} : vector<3x128xf32> to vector<1x128xf32>
    %19 = vector.broadcast %17 : vector<16x1xf32> to vector<16x128xf32>
    %20 = vector.broadcast %18 : vector<1x128xf32> to vector<16x128xf32>
    %21 = arith.subf %19, %20 : vector<16x128xf32>
    %22 = arith.mulf %21, %21 : vector<16x128xf32>
    %23 = arith.addf %16, %22 : vector<16x128xf32>
    %24 = tpu.iota {dimensions = array<i32: 0>} : vector<16x128xi32>
    %25 = tpu.bitcast %23 : vector<16x128xf32> -> vector<16x128xi32>
    %c-16_i32 = arith.constant -16 : i32
    %26 = vector.broadcast %c-16_i32 : i32 to vector<16x128xi32>
    %27 = arith.andi %25, %26 : vector<16x128xi32>
    %28 = arith.ori %27, %24 : vector<16x128xi32>
    %29 = tpu.bitcast %28 : vector<16x128xi32> -> vector<16x128xf32>
    %cst = arith.constant dense<0x7F800000> : vector<128xf32>
    %30 = vector.multi_reduction <minimumf>, %29, %cst [0] : vector<16x128xf32> to vector<128xf32>
    %31 = vector.shape_cast %30 : vector<128xf32> to vector<1x128xf32>
    %32 = tpu.bitcast %31 : vector<1x128xf32> -> vector<1x128xi32>
    %c15_i32 = arith.constant 15 : i32
    %33 = vector.broadcast %c15_i32 : i32 to vector<1x128xi32>
    %34 = arith.andi %32, %33 : vector<1x128xi32>
    %c-16_i32_5 = arith.constant -16 : i32
    %35 = vector.broadcast %c-16_i32_5 : i32 to vector<1x128xi32>
    %36 = arith.andi %32, %35 : vector<1x128xi32>
    %37 = tpu.bitcast %36 : vector<1x128xi32> -> vector<1x128xf32>
    %cst_6 = arith.constant 9.99999993E-9 : f32
    %38 = vector.broadcast %cst_6 : f32 to vector<1x128xf32>
    %39 = arith.addf %37, %38 : vector<1x128xf32>
    %40 = tpu.reciprocal %39 {approx = true} : vector<1x128xf32> -> vector<1x128xf32>
    %41 = vector.broadcast %34 : vector<1x128xi32> to vector<16x128xi32>
    %42 = arith.cmpi eq, %24, %41 : vector<16x128xi32>
    %cst_7 = arith.constant 0.000000e+00 : f32
    %43 = vector.shape_cast %40 : vector<1x128xf32> to vector<1x128xf32>
    %44 = vector.broadcast %43 : vector<1x128xf32> to vector<16x128xf32>
    %45 = vector.broadcast %cst_7 : f32 to vector<16x128xf32>
    %46 = arith.select %42, %44, %45 : vector<16x128xi1>, vector<16x128xf32>
    %cst_8 = arith.constant 3.000000e+38 : f32
    %47 = vector.broadcast %cst_8 : f32 to vector<16x128xf32>
    %48 = arith.select %42, %47, %29 : vector<16x128xi1>, vector<16x128xf32>
    %cst_9 = arith.constant dense<0x7F800000> : vector<128xf32>
    %49 = vector.multi_reduction <minimumf>, %48, %cst_9 [0] : vector<16x128xf32> to vector<128xf32>
    %50 = vector.shape_cast %49 : vector<128xf32> to vector<1x128xf32>
    %51 = tpu.bitcast %50 : vector<1x128xf32> -> vector<1x128xi32>
    %c15_i32_10 = arith.constant 15 : i32
    %52 = vector.broadcast %c15_i32_10 : i32 to vector<1x128xi32>
    %53 = arith.andi %51, %52 : vector<1x128xi32>
    %c-16_i32_11 = arith.constant -16 : i32
    %54 = vector.broadcast %c-16_i32_11 : i32 to vector<1x128xi32>
    %55 = arith.andi %51, %54 : vector<1x128xi32>
    %56 = tpu.bitcast %55 : vector<1x128xi32> -> vector<1x128xf32>
    %cst_12 = arith.constant 9.99999993E-9 : f32
    %57 = vector.broadcast %cst_12 : f32 to vector<1x128xf32>
    %58 = arith.addf %56, %57 : vector<1x128xf32>
    %59 = tpu.reciprocal %58 {approx = true} : vector<1x128xf32> -> vector<1x128xf32>
    %60 = vector.broadcast %53 : vector<1x128xi32> to vector<16x128xi32>
    %61 = arith.cmpi eq, %24, %60 : vector<16x128xi32>
    %cst_13 = arith.constant 0.000000e+00 : f32
    %62 = vector.shape_cast %59 : vector<1x128xf32> to vector<1x128xf32>
    %63 = vector.broadcast %62 : vector<1x128xf32> to vector<16x128xf32>
    %64 = vector.broadcast %cst_13 : f32 to vector<16x128xf32>
    %65 = arith.select %61, %63, %64 : vector<16x128xi1>, vector<16x128xf32>
    %66 = arith.addf %46, %65 : vector<16x128xf32>
    %67 = arith.addf %40, %59 : vector<1x128xf32>
    %cst_14 = arith.constant 3.000000e+38 : f32
    %68 = vector.broadcast %cst_14 : f32 to vector<16x128xf32>
    %69 = arith.select %61, %68, %48 : vector<16x128xi1>, vector<16x128xf32>
    %cst_15 = arith.constant dense<0x7F800000> : vector<128xf32>
    %70 = vector.multi_reduction <minimumf>, %69, %cst_15 [0] : vector<16x128xf32> to vector<128xf32>
    %71 = vector.shape_cast %70 : vector<128xf32> to vector<1x128xf32>
    %72 = tpu.bitcast %71 : vector<1x128xf32> -> vector<1x128xi32>
    %c15_i32_16 = arith.constant 15 : i32
    %73 = vector.broadcast %c15_i32_16 : i32 to vector<1x128xi32>
    %74 = arith.andi %72, %73 : vector<1x128xi32>
    %c-16_i32_17 = arith.constant -16 : i32
    %75 = vector.broadcast %c-16_i32_17 : i32 to vector<1x128xi32>
    %76 = arith.andi %72, %75 : vector<1x128xi32>
    %77 = tpu.bitcast %76 : vector<1x128xi32> -> vector<1x128xf32>
    %cst_18 = arith.constant 9.99999993E-9 : f32
    %78 = vector.broadcast %cst_18 : f32 to vector<1x128xf32>
    %79 = arith.addf %77, %78 : vector<1x128xf32>
    %80 = tpu.reciprocal %79 {approx = true} : vector<1x128xf32> -> vector<1x128xf32>
    %81 = vector.broadcast %74 : vector<1x128xi32> to vector<16x128xi32>
    %82 = arith.cmpi eq, %24, %81 : vector<16x128xi32>
    %cst_19 = arith.constant 0.000000e+00 : f32
    %83 = vector.shape_cast %80 : vector<1x128xf32> to vector<1x128xf32>
    %84 = vector.broadcast %83 : vector<1x128xf32> to vector<16x128xf32>
    %85 = vector.broadcast %cst_19 : f32 to vector<16x128xf32>
    %86 = arith.select %82, %84, %85 : vector<16x128xi1>, vector<16x128xf32>
    %87 = arith.addf %66, %86 : vector<16x128xf32>
    %88 = arith.addf %67, %80 : vector<1x128xf32>
    %c0_20 = arith.constant 0 : index
    %c0_21 = arith.constant 0 : index
    %c0_22 = arith.constant 0 : index
    %89 = vector.load %arg4[%c0_20, %c0_21, %c0_22] : memref<1x8x16xbf16, #tpu.memory_space<vmem>>, vector<1x8x16xbf16>
    %90 = vector.shape_cast %89 : vector<1x8x16xbf16> to vector<8x16xbf16>
    %91 = arith.truncf %87 : vector<16x128xf32> to vector<16x128xbf16>
    %cst_23 = arith.constant dense<0.000000e+00> : vector<8x128xf32>
    %92 = tpu.matmul %90, %91, %cst_23 {dimension_numbers = #tpu.dot_dimension_numbers<[1], [0], [0], [1], [0, 0, 1, 1], [], []>} : vector<8x16xbf16>, vector<16x128xbf16>, vector<8x128xf32> -> vector<8x128xf32>
    %93 = tpu.reciprocal %88 {approx = true} : vector<1x128xf32> -> vector<1x128xf32>
    %94 = vector.broadcast %93 : vector<1x128xf32> to vector<8x128xf32>
    %95 = arith.mulf %92, %94 : vector<8x128xf32>
    %c0_24 = arith.constant 0 : index
    %c0_25 = arith.constant 0 : index
    %96 = vector.load %arg6[%c0_24, %c0_25] : memref<32x4xbf16, #tpu.memory_space<vmem>>, vector<32x4xbf16>
    %c0_26 = arith.constant 0 : index
    %c0_27 = arith.constant 0 : index
    %97 = vector.load %arg7[%c0_26, %c0_27] : memref<32x8xbf16, #tpu.memory_space<vmem>>, vector<32x8xbf16>
    %c0_28 = arith.constant 0 : index
    %c0_29 = arith.constant 0 : index
    %98 = vector.load %arg8[%c0_28, %c0_29] : memref<32x1xf32, #tpu.memory_space<vmem>>, vector<32x1xf32>
    %c0_30 = arith.constant 0 : index
    %c0_31 = arith.constant 0 : index
    %c0_32 = arith.constant 0 : index
    %99 = vector.load %arg5[%c0_30, %c0_31, %c0_32] : memref<1x4x128xf32, #tpu.memory_space<vmem>>, vector<1x4x128xf32>
    %100 = vector.shape_cast %99 : vector<1x4x128xf32> to vector<4x128xf32>
    %101 = arith.truncf %100 : vector<4x128xf32> to vector<4x128xbf16>
    %cst_33 = arith.constant dense<0.000000e+00> : vector<32x128xf32>
    %102 = tpu.matmul %96, %101, %cst_33 {dimension_numbers = #tpu.dot_dimension_numbers<[1], [0], [0], [1], [0, 0, 1, 1], [], []>} : vector<32x4xbf16>, vector<4x128xbf16>, vector<32x128xf32> -> vector<32x128xf32>
    %103 = arith.truncf %95 : vector<8x128xf32> to vector<8x128xbf16>
    %cst_34 = arith.constant dense<0.000000e+00> : vector<32x128xf32>
    %104 = tpu.matmul %97, %103, %cst_34 {dimension_numbers = #tpu.dot_dimension_numbers<[1], [0], [0], [1], [0, 0, 1, 1], [], []>} : vector<32x8xbf16>, vector<8x128xbf16>, vector<32x128xf32> -> vector<32x128xf32>
    %105 = arith.addf %102, %104 : vector<32x128xf32>
    %106 = vector.broadcast %98 : vector<32x1xf32> to vector<32x128xf32>
    %107 = arith.addf %105, %106 : vector<32x128xf32>
    %cst_35 = arith.constant 0.000000e+00 : f32
    %108 = vector.broadcast %cst_35 : f32 to vector<32x128xf32>
    %109 = arith.maximumf %107, %108 : vector<32x128xf32>
    %c0_36 = arith.constant 0 : index
    %c0_37 = arith.constant 0 : index
    %110 = vector.load %arg9[%c0_36, %c0_37] : memref<16x32xbf16, #tpu.memory_space<vmem>>, vector<16x32xbf16>
    %c0_38 = arith.constant 0 : index
    %c0_39 = arith.constant 0 : index
    %111 = vector.load %arg10[%c0_38, %c0_39] : memref<16x1xf32, #tpu.memory_space<vmem>>, vector<16x1xf32>
    %112 = arith.truncf %109 : vector<32x128xf32> to vector<32x128xbf16>
    %cst_40 = arith.constant dense<0.000000e+00> : vector<16x128xf32>
    %113 = tpu.matmul %110, %112, %cst_40 {dimension_numbers = #tpu.dot_dimension_numbers<[1], [0], [0], [1], [0, 0, 1, 1], [], []>} : vector<16x32xbf16>, vector<32x128xbf16>, vector<16x128xf32> -> vector<16x128xf32>
    %114 = vector.broadcast %111 : vector<16x1xf32> to vector<16x128xf32>
    %115 = arith.addf %113, %114 : vector<16x128xf32>
    %cst_41 = arith.constant 0.000000e+00 : f32
    %116 = vector.broadcast %cst_41 : f32 to vector<16x128xf32>
    %117 = arith.maximumf %115, %116 : vector<16x128xf32>
    %c0_42 = arith.constant 0 : index
    %c0_43 = arith.constant 0 : index
    %c0_44 = arith.constant 0 : index
    %118 = vector.load %arg11[%c0_42, %c0_43, %c0_44] : memref<1x16x128xf32, #tpu.memory_space<vmem>>, vector<1x16x128xf32>
    %119 = vector.shape_cast %118 : vector<1x16x128xf32> to vector<16x128xf32>
    %120 = vector.shape_cast %117 : vector<16x128xf32> to vector<1x16x128xf32>
    tpu.vector_store %arg11[%c0_42, %c0_43, %c0_44], %120 {strides = array<i32>} : memref<1x16x128xf32, #tpu.memory_space<vmem>>, vector<1x16x128xf32>,
    return
  }
  func.func @transform_0(%arg0: i32, %arg1: i32) -> (i32, i32, i32) {
    %c0_i32 = arith.constant 0 : i32
    %c0_i32_0 = arith.constant 0 : i32
    return %arg0, %c0_i32, %arg1 : i32, i32, i32
  }
  func.func @transform_1(%arg0: i32, %arg1: i32) -> (i32, i32, i32) {
    %c0_i32 = arith.constant 0 : i32
    %c0_i32_0 = arith.constant 0 : i32
    %c0_i32_1 = arith.constant 0 : i32
    return %arg0, %c0_i32, %c0_i32_0 : i32, i32, i32
  }
  func.func @transform_2(%arg0: i32, %arg1: i32) -> (i32, i32, i32) {
    %c0_i32 = arith.constant 0 : i32
    %c0_i32_0 = arith.constant 0 : i32
    %c0_i32_1 = arith.constant 0 : i32
    return %arg0, %c0_i32, %c0_i32_0 : i32, i32, i32
  }
  func.func @transform_3(%arg0: i32, %arg1: i32) -> (i32, i32, i32) {
    %c0_i32 = arith.constant 0 : i32
    %c0_i32_0 = arith.constant 0 : i32
    return %arg0, %c0_i32, %arg1 : i32, i32, i32
  }
  func.func @transform_4(%arg0: i32, %arg1: i32) -> (i32, i32) {
    %c0_i32 = arith.constant 0 : i32
    %c0_i32_0 = arith.constant 0 : i32
    %c0_i32_1 = arith.constant 0 : i32
    return %c0_i32, %c0_i32_0 : i32, i32
  }
  func.func @transform_5(%arg0: i32, %arg1: i32) -> (i32, i32) {
    %c0_i32 = arith.constant 0 : i32
    %c0_i32_0 = arith.constant 0 : i32
    %c0_i32_1 = arith.constant 0 : i32
    return %c0_i32, %c0_i32_0 : i32, i32
  }
  func.func @transform_6(%arg0: i32, %arg1: i32) -> (i32, i32) {
    %c0_i32 = arith.constant 0 : i32
    %c0_i32_0 = arith.constant 0 : i32
    %c0_i32_1 = arith.constant 0 : i32
    return %c0_i32, %c0_i32_0 : i32, i32
  }
  func.func @transform_7(%arg0: i32, %arg1: i32) -> (i32, i32) {
    %c0_i32 = arith.constant 0 : i32
    %c0_i32_0 = arith.constant 0 : i32
    %c0_i32_1 = arith.constant 0 : i32
    return %c0_i32, %c0_i32_0 : i32, i32
  }
  func.func @transform_8(%arg0: i32, %arg1: i32) -> (i32, i32) {
    %c0_i32 = arith.constant 0 : i32
    %c0_i32_0 = arith.constant 0 : i32
    %c0_i32_1 = arith.constant 0 : i32
    return %c0_i32, %c0_i32_0 : i32, i32
  }
  func.func @transform_9(%arg0: i32, %arg1: i32) -> (i32, i32, i32) {
    %c0_i32 = arith.constant 0 : i32
    %c0_i32_0 = arith.constant 0 : i32
    return %arg0, %c0_i32, %arg1 : i32, i32, i32
  }
}

</mosaic_0001>

<llo_original>
// kernel: tpu_custom_call.1
$region0: #{tpu_custom_call.1}
  #allocation0 [shape = 'u32[]', space=smem, size = 0x4, offset = 0x4, fixed_abs, tag = 'smem constant byte address 0x4 - core index']
  #allocation1 [shape = 'u32[144,128]{1,0:T(1,128)}', space=vmem, size = 0x12000, scoped, tag = 'internal scratch']
  %s0 = inlined_call_operand.vmem [shape: f32[2,3,128], index: 0, kind: input, shape index: {}]
  %s1 = inlined_call_operand.vmem [shape: f32[2,16,3], index: 1, kind: input, shape index: {}]
  %s2 = inlined_call_operand.vmem [shape: bf16[2,8,16], index: 2, kind: input, shape index: {}]
  %s3 = inlined_call_operand.vmem [shape: f32[2,4,128], index: 3, kind: input, shape index: {}]
  %s4 = inlined_call_operand.vmem [shape: bf16[32,4], index: 4, kind: input, shape index: {}]
  %s5 = inlined_call_operand.vmem [shape: bf16[32,8], index: 5, kind: input, shape index: {}]
  %s6 = inlined_call_operand.vmem [shape: f32[32,1], index: 6, kind: input, shape index: {}]
  %s7 = inlined_call_operand.vmem [shape: bf16[16,32], index: 7, kind: input, shape index: {}]
  %s8 = inlined_call_operand.vmem [shape: f32[16,1], index: 8, kind: input, shape index: {}]
  %s9 = inlined_call_operand.hbm [shape: f32[2,16,128], index: 9, kind: output, shape index: {}]
  %s10 = sld [smem:[#allocation0]]
  $region69: #{tpu_custom_call.1} parent=0
    _
  %s12 = ssub.s32 1, %s10
  %s13 = scalar_select 0, %s12, %s10
  $region1: #{tpu_custom_call.1} parent=0
    #allocation2 [shape = 'u8[16384]{0}', space=vmem, size = 0x4000, scoped, tag = 'output window, operand 0']
    #allocation3 [shape = 's32[2]{0}', space=sflag, size = 0x8, scoped, tag = 'scoped memory for tpu_custom_call.1']
    %14 = vsyncpa [#allocation3], 0
    %s15 = scalar_lea.sflag [#allocation3], 1
    %16 = vsyncpa %s15, 0
    loop: start=0, step=1, limit=4
    $region2: #{tpu_custom_call.1} parent=1 // loop_pre_header
      _
    $region3: #{tpu_custom_call.1} parent=1 // loop_header
      %s18 = sphi 0, %s22
      %p19 = scmp.ge.s32.totalorder %s18, 4
      %s25 = sphi 0, %s37
      %s26 = sphi 0, %s33
      %s27 = sphi 0, %s25
      %s28 = sphi 0, %s26
      %s29 = sphi 0, %s27
      %s30 = sphi 0, %s28
      %s42 = sphi 0, %s44
      %s45 = sphi 0, %s42
      %s46 = sphi 0, %s45
      %s62 = sphi 0, %s46
      %s68 = sphi 0, %s70
      %s71 = sphi 0, %s68
      %s72 = sphi 0, %s71
      %s88 = sphi 0, %s72
      %s94 = sphi 0, %s96
      %s97 = sphi 0, %s94
      %s98 = sphi 0, %s97
      %s114 = sphi 0, %s98
      %s122 = sphi 0, %s124
      %s125 = sphi 0, %s122
      %s126 = sphi 0, %s125
      %s142 = sphi 0, %s126
      %s146 = sphi 0, %s146
      %s148 = sphi 0, %s146
      %s149 = sphi 0, %s148
      %s163 = sphi 0, %s149
      %s167 = sphi 0, %s167
      %s169 = sphi 0, %s167
      %s170 = sphi 0, %s169
      %s184 = sphi 0, %s170
      %s188 = sphi 0, %s188
      %s190 = sphi 0, %s188
      %s191 = sphi 0, %s190
      %s205 = sphi 0, %s191
      %s209 = sphi 0, %s209
      %s211 = sphi 0, %s209
      %s212 = sphi 0, %s211
      %s226 = sphi 0, %s212
      %s230 = sphi 0, %s230
      %s232 = sphi 0, %s230
      %s233 = sphi 0, %s232
      %s247 = sphi 0, %s233
      %s255 = sphi 0, %s257
      %s258 = sphi 0, %s255
      %s259 = sphi 0, %s258
      %s275 = sphi 0, %s259
    $region4: #{tpu_custom_call.1} parent=1 // loop_header_branch
      %21 = sbr.rel (%p19) target = $region8
    $region5: #{tpu_custom_call.1} parent=1 // loop_body
      %s23 = ssub.s32 %s18, 1
      %s24 = ssub.s32 %s18, 2
      %s31 = sadd.s32 1, %s26
      %p32 = scmp.ge.s32.totalorder %s31, 1
      %s33 = scalar_select %p32, 0, %s31
      %s34 = sadd.s32 1, %s25
      %s35 = scalar_select %p32, %s34, %s25
      %p36 = scmp.ge.s32.totalorder %s35, 2
      %s37 = scalar_select %p36, 0, %s35
      %s38 = ssub.s32 %s25, %s37
      %s39 = ssub.s32 %s26, %s33
      %s40 = sor.u32 %s38, %s39
      %p41 = scmp.eq.s32.totalorder %s40, 0
      %s43 = sadd.s32 %s42, 1
      %s44 = scalar_select %p41, %s42, %s43
      %p47 = pneg %p41
      %p48 = scmp.eq.s32.totalorder %s18, 1
      %p49 = por %p47, %p48
      %p50 = scmp.ne.s32.totalorder %s42, %s45
      %p51 = scmp.eq.s32.totalorder %s18, 0
      %p52 = por %p50, %p51
      %p53 = scmp.ne.s32.totalorder %s42, %s45
      %p54 = scmp.eq.s32.totalorder %s23, 1
      %p55 = por %p53, %p54
      %p56 = scmp.ne.s32.totalorder %s45, %s46
      %p57 = scmp.eq.s32.totalorder %s23, 0
      %p58 = por %p56, %p57
      %p59 = scmp.ne.s32.totalorder %s45, %s46
      %p60 = scmp.eq.s32.totalorder %s24, 1
      %p61 = por %p59, %p60
      %p63 = scmp.ne.s32.totalorder %s46, %s62
      %p64 = scmp.eq.s32.totalorder %s24, 0
      %p65 = por %p63, %p64
      %s66 = ssub.s32 %s25, %s37
      %p67 = scmp.eq.s32.totalorder %s66, 0
      %s69 = sadd.s32 %s68, 1
      %s70 = scalar_select %p67, %s68, %s69
      %p73 = pneg %p67
      %p74 = scmp.eq.s32.totalorder %s18, 1
      %p75 = por %p73, %p74
      %p76 = scmp.ne.s32.totalorder %s68, %s71
      %p77 = scmp.eq.s32.totalorder %s18, 0
      %p78 = por %p76, %p77
      %p79 = scmp.ne.s32.totalorder %s68, %s71
      %p80 = scmp.eq.s32.totalorder %s23, 1
      %p81 = por %p79, %p80
      %p82 = scmp.ne.s32.totalorder %s71, %s72
      %p83 = scmp.eq.s32.totalorder %s23, 0
      %p84 = por %p82, %p83
      %p85 = scmp.ne.s32.totalorder %s71, %s72
      %p86 = scmp.eq.s32.totalorder %s24, 1
      %p87 = por %p85, %p86
      %p89 = scmp.ne.s32.totalorder %s72, %s88
      %p90 = scmp.eq.s32.totalorder %s24, 0
      %p91 = por %p89, %p90
      %s92 = ssub.s32 %s25, %s37
      %p93 = scmp.eq.s32.totalorder %s92, 0
      %s95 = sadd.s32 %s94, 1
      %s96 = scalar_select %p93, %s94, %s95
      %p99 = pneg %p93
      %p100 = scmp.eq.s32.totalorder %s18, 1
      %p101 = por %p99, %p100
      %p102 = scmp.ne.s32.totalorder %s94, %s97
      %p103 = scmp.eq.s32.totalorder %s18, 0
      %p104 = por %p102, %p103
      %p105 = scmp.ne.s32.totalorder %s94, %s97
      %p106 = scmp.eq.s32.totalorder %s23, 1
      %p107 = por %p105, %p106
      %p108 = scmp.ne.s32.totalorder %s97, %s98
      %p109 = scmp.eq.s32.totalorder %s23, 0
      %p110 = por %p108, %p109
      %p111 = scmp.ne.s32.totalorder %s97, %s98
      %p112 = scmp.eq.s32.totalorder %s24, 1
      %p113 = por %p111, %p112
      %p115 = scmp.ne.s32.totalorder %s98, %s114
      %p116 = scmp.eq.s32.totalorder %s24, 0
      %p117 = por %p115, %p116
      %s118 = ssub.s32 %s25, %s37
      %s119 = ssub.s32 %s26, %s33
      %s120 = sor.u32 %s118, %s119
      %p121 = scmp.eq.s32.totalorder %s120, 0
      %s123 = sadd.s32 %s122, 1
      %s124 = scalar_select %p121, %s122, %s123
      %p127 = pneg %p121
      %p128 = scmp.eq.s32.totalorder %s18, 1
      %p129 = por %p127, %p128
      %p130 = scmp.ne.s32.totalorder %s122, %s125
      %p131 = scmp.eq.s32.totalorder %s18, 0
      %p132 = por %p130, %p131
      %p133 = scmp.ne.s32.totalorder %s122, %s125
      %p134 = scmp.eq.s32.totalorder %s23, 1
      %p135 = por %p133, %p134
      %p136 = scmp.ne.s32.totalorder %s125, %s126
      %p137 = scmp.eq.s32.totalorder %s23, 0
      %p138 = por %p136, %p137
      %p139 = scmp.ne.s32.totalorder %s125, %s126
      %p140 = scmp.eq.s32.totalorder %s24, 1
      %p141 = por %p139, %p140
      %p143 = scmp.ne.s32.totalorder %s126, %s142
      %p144 = scmp.eq.s32.totalorder %s24, 0
      %p145 = por %p143, %p144
      %s147 = sadd.s32 %s146, 1
      %p150 = scmp.eq.s32.totalorder %s18, 1
      %p151 = scmp.ne.s32.totalorder %s146, %s148
      %p152 = scmp.eq.s32.totalorder %s18, 0
      %p153 = por %p151, %p152
      %p154 = scmp.ne.s32.totalorder %s146, %s148
      %p155 = scmp.eq.s32.totalorder %s23, 1
      %p156 = por %p154, %p155
      %p157 = scmp.ne.s32.totalorder %s148, %s149
      %p158 = scmp.eq.s32.totalorder %s23, 0
      %p159 = por %p157, %p158
      %p160 = scmp.ne.s32.totalorder %s148, %s149
      %p161 = scmp.eq.s32.totalorder %s24, 1
      %p162 = por %p160, %p161
      %p164 = scmp.ne.s32.totalorder %s149, %s163
      %p165 = scmp.eq.s32.totalorder %s24, 0
      %p166 = por %p164, %p165
      %s168 = sadd.s32 %s167, 1
      %p171 = scmp.eq.s32.totalorder %s18, 1
      %p172 = scmp.ne.s32.totalorder %s167, %s169
      %p173 = scmp.eq.s32.totalorder %s18, 0
      %p174 = por %p172, %p173
      %p175 = scmp.ne.s32.totalorder %s167, %s169
      %p176 = scmp.eq.s32.totalorder %s23, 1
      %p177 = por %p175, %p176
      %p178 = scmp.ne.s32.totalorder %s169, %s170
      %p179 = scmp.eq.s32.totalorder %s23, 0
      %p180 = por %p178, %p179
      %p181 = scmp.ne.s32.totalorder %s169, %s170
      %p182 = scmp.eq.s32.totalorder %s24, 1
      %p183 = por %p181, %p182
      %p185 = scmp.ne.s32.totalorder %s170, %s184
      %p186 = scmp.eq.s32.totalorder %s24, 0
      %p187 = por %p185, %p186
      %s189 = sadd.s32 %s188, 1
      %p192 = scmp.eq.s32.totalorder %s18, 1
      %p193 = scmp.ne.s32.totalorder %s188, %s190
      %p194 = scmp.eq.s32.totalorder %s18, 0
      %p195 = por %p193, %p194
      %p196 = scmp.ne.s32.totalorder %s188, %s190
      %p197 = scmp.eq.s32.totalorder %s23, 1
      %p198 = por %p196, %p197
      %p199 = scmp.ne.s32.totalorder %s190, %s191
      %p200 = scmp.eq.s32.totalorder %s23, 0
      %p201 = por %p199, %p200
      %p202 = scmp.ne.s32.totalorder %s190, %s191
      %p203 = scmp.eq.s32.totalorder %s24, 1
      %p204 = por %p202, %p203
      %p206 = scmp.ne.s32.totalorder %s191, %s205
      %p207 = scmp.eq.s32.totalorder %s24, 0
      %p208 = por %p206, %p207
      %s210 = sadd.s32 %s209, 1
      %p213 = scmp.eq.s32.totalorder %s18, 1
      %p214 = scmp.ne.s32.totalorder %s209, %s211
      %p215 = scmp.eq.s32.totalorder %s18, 0
      %p216 = por %p214, %p215
      %p217 = scmp.ne.s32.totalorder %s209, %s211
      %p218 = scmp.eq.s32.totalorder %s23, 1
      %p219 = por %p217, %p218
      %p220 = scmp.ne.s32.totalorder %s211, %s212
      %p221 = scmp.eq.s32.totalorder %s23, 0
      %p222 = por %p220, %p221
      %p223 = scmp.ne.s32.totalorder %s211, %s212
      %p224 = scmp.eq.s32.totalorder %s24, 1
      %p225 = por %p223, %p224
      %p227 = scmp.ne.s32.totalorder %s212, %s226
      %p228 = scmp.eq.s32.totalorder %s24, 0
      %p229 = por %p227, %p228
      %s231 = sadd.s32 %s230, 1
      %p234 = scmp.eq.s32.totalorder %s18, 1
      %p235 = scmp.ne.s32.totalorder %s230, %s232
      %p236 = scmp.eq.s32.totalorder %s18, 0
      %p237 = por %p235, %p236
      %p238 = scmp.ne.s32.totalorder %s230, %s232
      %p239 = scmp.eq.s32.totalorder %s23, 1
      %p240 = por %p238, %p239
      %p241 = scmp.ne.s32.totalorder %s232, %s233
      %p242 = scmp.eq.s32.totalorder %s23, 0
      %p243 = por %p241, %p242
      %p244 = scmp.ne.s32.totalorder %s232, %s233
      %p245 = scmp.eq.s32.totalorder %s24, 1
      %p246 = por %p244, %p245
      %p248 = scmp.ne.s32.totalorder %s233, %s247
      %p249 = scmp.eq.s32.totalorder %s24, 0
      %p250 = por %p248, %p249
      %s251 = ssub.s32 %s25, %s37
      %s252 = ssub.s32 %s26, %s33
      %s253 = sor.u32 %s251, %s252
      %p254 = scmp.eq.s32.totalorder %s253, 0
      %s256 = sadd.s32 %s255, 1
      %s257 = scalar_select %p254, %s255, %s256
      %p260 = pneg %p254
      %p261 = scmp.eq.s32.totalorder %s18, 1
      %p262 = por %p260, %p261
      %p263 = scmp.ne.s32.totalorder %s255, %s258
      %p264 = scmp.eq.s32.totalorder %s18, 0
      %p265 = por %p263, %p264
      %p266 = scmp.ne.s32.totalorder %s255, %s258
      %p267 = scmp.eq.s32.totalorder %s23, 1
      %p268 = por %p266, %p267
      %p269 = scmp.ne.s32.totalorder %s258, %s259
      %p270 = scmp.eq.s32.totalorder %s23, 0
      %p271 = por %p269, %p270
      %p272 = scmp.ne.s32.totalorder %s258, %s259
      %p273 = scmp.eq.s32.totalorder %s24, 1
      %p274 = por %p272, %p273
      %p276 = scmp.ne.s32.totalorder %s259, %s275
      %p277 = scmp.eq.s32.totalorder %s24, 0
      %p278 = por %p276, %p277
      %p279 = scmp.le.s32.totalorder 1, %s18
      %p280 = scmp.lt.s32.totalorder %s18, 3
      %p281 = pnand %p279, %p280
      %p282 = pneg %p281
      // Predicated region
      $region9: #{tpu_custom_call.1} parent=5 // pred_check
        _
      $region10: #{tpu_custom_call.1} parent=5 // pred_check_branch
        %284 = sbr.rel (%p281) target = $region12
      $region11: #{tpu_custom_call.1} parent=5 // pred_region
        %s285 = ssub.s32 %s18, 1
        // Predicated region
        $region13: #{tpu_custom_call.1} parent=11 // pred_check
          %p286 = pneg %p159
        $region14: #{tpu_custom_call.1} parent=11 // pred_check_branch
          %288 = sbr.rel (%p286) target = $region16
        $region15: #{tpu_custom_call.1} parent=11 // pred_region
          _
        $region16: #{tpu_custom_call.1} parent=11 // pred_fallthru
          _
        // Predicated region
        $region17: #{tpu_custom_call.1} parent=11 // pred_check
          %p289 = pneg %p180
        $region18: #{tpu_custom_call.1} parent=11 // pred_check_branch
          %291 = sbr.rel (%p289) target = $region20
        $region19: #{tpu_custom_call.1} parent=11 // pred_region
          _
        $region20: #{tpu_custom_call.1} parent=11 // pred_fallthru
          _
        // Predicated region
        $region21: #{tpu_custom_call.1} parent=11 // pred_check
          %p292 = pneg %p201
        $region22: #{tpu_custom_call.1} parent=11 // pred_check_branch
          %294 = sbr.rel (%p292) target = $region24
        $region23: #{tpu_custom_call.1} parent=11 // pred_region
          _
        $region24: #{tpu_custom_call.1} parent=11 // pred_fallthru
          _
        // Predicated region
        $region25: #{tpu_custom_call.1} parent=11 // pred_check
          %p295 = pneg %p222
        $region26: #{tpu_custom_call.1} parent=11 // pred_check_branch
          %297 = sbr.rel (%p295) target = $region28
        $region27: #{tpu_custom_call.1} parent=11 // pred_region
          _
        $region28: #{tpu_custom_call.1} parent=11 // pred_fallthru
          _
        // Predicated region
        $region29: #{tpu_custom_call.1} parent=11 // pred_check
          %p298 = pneg %p243
        $region30: #{tpu_custom_call.1} parent=11 // pred_check_branch
          %300 = sbr.rel (%p298) target = $region32
        $region31: #{tpu_custom_call.1} parent=11 // pred_region
          _
        $region32: #{tpu_custom_call.1} parent=11 // pred_fallthru
          _
      $region12: #{tpu_custom_call.1} parent=5 // pred_fallthru
        _
      %p301 = scmp.lt.s32.totalorder %s18, 2
      // Predicated region
      $region33: #{tpu_custom_call.1} parent=5 // pred_check
        %p302 = pneg %p301
      $region34: #{tpu_custom_call.1} parent=5 // pred_check_branch
        %304 = sbr.rel (%p302) target = $region36
      $region35: #{tpu_custom_call.1} parent=5 // pred_region
        // Predicated region
        $region37: #{tpu_custom_call.1} parent=35 // pred_check
          %p305 = pneg %p52
        $region38: #{tpu_custom_call.1} parent=35 // pred_check_branch
          %307 = sbr.rel (%p305) target = $region40
        $region39: #{tpu_custom_call.1} parent=35 // pred_region
          %p308 = scmp.lt.s32.totalorder %s25, 1
          %s309 = scalar_select %p308, %s25, 1
          %p310 = scmp.lt.s32.totalorder %s26, 0
          %s311 = scalar_select %p310, %s26, 0
          %s312 = sadd.s32 %s311, %s309
          %s313 = smul.addr %s312, 4
          %s314 = scalar_lea.vmem %s0, %s313
        $region40: #{tpu_custom_call.1} parent=35 // pred_fallthru
          _
        // Predicated region
        $region41: #{tpu_custom_call.1} parent=35 // pred_check
          %p315 = pneg %p78
        $region42: #{tpu_custom_call.1} parent=35 // pred_check_branch
          %317 = sbr.rel (%p315) target = $region44
        $region43: #{tpu_custom_call.1} parent=35 // pred_region
          %p318 = scmp.lt.s32.totalorder %s25, 1
          %s319 = scalar_select %p318, %s25, 1
          %s320 = smul.addr %s319, 2
          %s321 = smul.addr %s320, 8
          %s322 = scalar_lea.vmem %s1, %s321
        $region44: #{tpu_custom_call.1} parent=35 // pred_fallthru
          _
        // Predicated region
        $region45: #{tpu_custom_call.1} parent=35 // pred_check
          %p323 = pneg %p104
        $region46: #{tpu_custom_call.1} parent=35 // pred_check_branch
          %325 = sbr.rel (%p323) target = $region48
        $region47: #{tpu_custom_call.1} parent=35 // pred_region
          %p326 = scmp.lt.s32.totalorder %s25, 1
          %s327 = scalar_select %p326, %s25, 1
          %s328 = smul.addr %s327, 4
          %s329 = scalar_lea.vmem %s2, %s328
        $region48: #{tpu_custom_call.1} parent=35 // pred_fallthru
          _
        // Predicated region
        $region49: #{tpu_custom_call.1} parent=35 // pred_check
          %p330 = pneg %p132
        $region50: #{tpu_custom_call.1} parent=35 // pred_check_branch
          %332 = sbr.rel (%p330) target = $region52
        $region51: #{tpu_custom_call.1} parent=35 // pred_region
          %p333 = scmp.lt.s32.totalorder %s25, 1
          %s334 = scalar_select %p333, %s25, 1
          %p335 = scmp.lt.s32.totalorder %s26, 0
          %s336 = scalar_select %p335, %s26, 0
          %s337 = sadd.s32 %s336, %s334
          %s338 = smul.addr %s337, 4
          %s339 = scalar_lea.vmem %s3, %s338
        $region52: #{tpu_custom_call.1} parent=35 // pred_fallthru
          _
      $region36: #{tpu_custom_call.1} parent=5 // pred_fallthru
        _
      %p340 = scmp.le.s32.totalorder 1, %s18
      %p341 = scmp.lt.s32.totalorder %s18, 3
      %p342 = pnand %p340, %p341
      %p343 = pneg %p342
      // Predicated region
      $region53: #{tpu_custom_call.1} parent=5 // pred_check
        _
      $region54: #{tpu_custom_call.1} parent=5 // pred_check_branch
        %345 = sbr.rel (%p342) target = $region56
      $region55: #{tpu_custom_call.1} parent=5 // pred_region
        %s346 = ssub.s32 %s18, 1
        %p347 = scmp.lt.s32.totalorder %s27, 1
        %s348 = scalar_select %p347, %s27, 1
        %p349 = scmp.lt.s32.totalorder %s28, 0
        %s350 = scalar_select %p349, %s28, 0
        %s351 = sadd.s32 %s350, %s348
        %s352 = smul.addr %s351, 4
        %s353 = scalar_lea.vmem %s0, %s352
        %p354 = pneg %p58
        %p355 = pneg %p55
        %p356 = scmp.lt.s32.totalorder %s27, 1
        %s357 = scalar_select %p356, %s27, 1
        %s358 = smul.addr %s357, 2
        %s359 = smul.addr %s358, 8
        %s360 = scalar_lea.vmem %s1, %s359
        %p361 = pneg %p84
        %p362 = pneg %p81
        %p363 = scmp.lt.s32.totalorder %s27, 1
        %s364 = scalar_select %p363, %s27, 1
        %s365 = smul.addr %s364, 4
        %s366 = scalar_lea.vmem %s2, %s365
        %p367 = pneg %p110
        %p368 = pneg %p107
        %p369 = scmp.lt.s32.totalorder %s27, 1
        %s370 = scalar_select %p369, %s27, 1
        %p371 = scmp.lt.s32.totalorder %s28, 0
        %s372 = scalar_select %p371, %s28, 0
        %s373 = sadd.s32 %s372, %s370
        %s374 = smul.addr %s373, 4
        %s375 = scalar_lea.vmem %s3, %s374
        %p376 = pneg %p138
        %p377 = pneg %p135
        %p378 = pneg %p159
        %p379 = pneg %p156
        %p380 = pneg %p180
        %p381 = pneg %p177
        %p382 = pneg %p201
        %p383 = pneg %p198
        %p384 = pneg %p222
        %p385 = pneg %p219
        %p386 = pneg %p243
        %p387 = pneg %p240
        %p388 = pneg %p271
        %p389 = pneg %p268
        %s390 = sand.u32 %s258, 1
        %s391 = scalar_lea.sflag [#allocation3], %s390
        %s392 = sand.u32 %s258, 1
        %s393 = smul.addr %s392, 16
        %s394 = scalar_lea.vmem [#allocation2], %s393
        %p395 = scmp.lt.s32.totalorder %s27, 1
        %s396 = scalar_select %p395, %s27, 1
        %p397 = scmp.lt.s32.totalorder %s28, 0
        %s398 = scalar_select %p397, %s28, 0
        %s399 = sadd.s32 %s398, %s396
        %s400 = smul.addr %s399, 4
        %s401 = scalar_lea.vmem %s0, %s400
        %p402 = scmp.lt.s32.totalorder %s27, 1
        %s403 = scalar_select %p402, %s27, 1
        %s404 = smul.addr %s403, 2
        %s405 = smul.addr %s404, 8
        %s406 = scalar_lea.vmem %s1, %s405
        %p407 = scmp.lt.s32.totalorder %s27, 1
        %s408 = scalar_select %p407, %s27, 1
        %s409 = smul.addr %s408, 4
        %s410 = scalar_lea.vmem %s2, %s409
        %p411 = scmp.lt.s32.totalorder %s27, 1
        %s412 = scalar_select %p411, %s27, 1
        %p413 = scmp.lt.s32.totalorder %s28, 0
        %s414 = scalar_select %p413, %s28, 0
        %s415 = sadd.s32 %s414, %s412
        %s416 = smul.addr %s415, 4
        %s417 = scalar_lea.vmem %s3, %s416
        %v419 = vld [vmem:[%s401] sm:$0x7]
        %v420 = vld [vmem:[%s406] sm:$0xff]
        %v421 = vld [vmem:[%s406 + $0x8] sm:$0xff]
        %423 = vset.pattern.permute.xlu0 0
        %424 = vperm.xlu0 %423, %v420
        %v425 = vpop.permute.xlu0 %424
        %428 = vset.pattern.permute.xlu0 0
        %429 = vperm.xlu0 %428, %v421
        %v430 = vpop.permute.xlu0 %429
        %v432 = vlaneseq
        %v433 = vshrl.u32 %v432, 7
        %v434 = vsub.s32 0, %v433
        %v435 = vrot.slane %v419, %v434
        %v436 = vsub.f32 %v425, %v435
        %v437 = vsub.f32 %v430, %v435
        %v438 = vmul.f32 %v436, %v436
        %v439 = vmul.f32 %v437, %v437
        %440 = vset.pattern.permute.xlu0 1
        %441 = vperm.xlu0 %440, %v420
        %v442 = vpop.permute.xlu0 %441
        %444 = vset.pattern.permute.xlu0 1
        %445 = vperm.xlu0 %444, %v421
        %v446 = vpop.permute.xlu0 %445
        %v448 = vlaneseq
        %v449 = vshrl.u32 %v448, 7
        %v450 = vsub.s32 1, %v449
        %v451 = vrot.slane %v419, %v450
        %v452 = vsub.f32 %v442, %v451
        %v453 = vsub.f32 %v446, %v451
        %v454 = vmul.f32 %v452, %v452
        %v455 = vmul.f32 %v453, %v453
        %v456 = vadd.f32 %v438, %v454
        %v457 = vadd.f32 %v439, %v455
        %458 = vset.pattern.permute.xlu0 2
        %459 = vperm.xlu0 %458, %v420
        %v460 = vpop.permute.xlu0 %459
        %462 = vset.pattern.permute.xlu0 2
        %463 = vperm.xlu0 %462, %v421
        %v464 = vpop.permute.xlu0 %463
        %v466 = vlaneseq
        %v467 = vshrl.u32 %v466, 7
        %v468 = vsub.s32 2, %v467
        %v469 = vrot.slane %v419, %v468
        %v470 = vsub.f32 %v460, %v469
        %v471 = vsub.f32 %v464, %v469
        %v472 = vmul.f32 %v470, %v470
        %v473 = vmul.f32 %v471, %v471
        %v474 = vadd.f32 %v456, %v472
        %v475 = vadd.f32 %v457, %v473
        %v476 = vlaneseq
        %v477 = vshrl.u32 %v476, 7
        %v478 = vadd.s32 %v477, 8
        %v481 = vand.u32 %v474, 4294967280
        %v482 = vand.u32 %v475, 4294967280
        %v483 = vor.u32 %v481, %v477
        %v484 = vor.u32 %v482, %v478
        %v487 = vmin.f32 %v483, %v484
        %v488 = vrot.slane %v487, 4
        %v489 = vmin.f32 %v487, %v488
        %v490 = vrot.slane %v489, 2
        %v491 = vmin.f32 %v489, %v490
        %v492 = vrot.slane %v491, 1
        %v493 = vmin.f32 %v491, %v492
        %v495 = vand.u32 %v493, 15
        %v496 = vand.u32 %v493, 4294967280
        %v498 = vadd.f32 %v496, 1e-08
        %v499 = vrcp.pop %v498
        %vm500 = vcmp.eq.s32.totalorder %v477, %v495
        %vm501 = vcmp.eq.s32.totalorder %v478, %v495
        %v502 = vsel %vm500, %v499, 0.0
        %v503 = vsel %vm501, %v499, 0.0
        %v504 = vsel %vm500, 3e+38, %v483
        %v505 = vsel %vm501, 3e+38, %v484
        %v506 = vmin.f32 %v504, %v505
        %v507 = vrot.slane %v506, 4
        %v508 = vmin.f32 %v506, %v507
        %v509 = vrot.slane %v508, 2
        %v510 = vmin.f32 %v508, %v509
        %v511 = vrot.slane %v510, 1
        %v512 = vmin.f32 %v510, %v511
        %v514 = vand.u32 %v512, 15
        %v515 = vand.u32 %v512, 4294967280
        %v517 = vadd.f32 %v515, 1e-08
        %v518 = vrcp.pop %v517
        %vm519 = vcmp.eq.s32.totalorder %v477, %v514
        %vm520 = vcmp.eq.s32.totalorder %v478, %v514
        %v521 = vsel %vm519, %v518, 0.0
        %v522 = vsel %vm520, %v518, 0.0
        %v523 = vadd.f32 %v502, %v521
        %v524 = vadd.f32 %v503, %v522
        %v525 = vadd.f32 %v499, %v518
        %v526 = vsel %vm519, 3e+38, %v504
        %v527 = vsel %vm520, 3e+38, %v505
        %v528 = vmin.f32 %v526, %v527
        %v529 = vrot.slane %v528, 4
        %v530 = vmin.f32 %v528, %v529
        %v531 = vrot.slane %v530, 2
        %v532 = vmin.f32 %v530, %v531
        %v533 = vrot.slane %v532, 1
        %v534 = vmin.f32 %v532, %v533
        %v536 = vand.u32 %v534, 15
        %v537 = vand.u32 %v534, 4294967280
        %v539 = vadd.f32 %v537, 1e-08
        %v540 = vrcp.pop %v539
        %vm541 = vcmp.eq.s32.totalorder %v477, %v536
        %vm542 = vcmp.eq.s32.totalorder %v478, %v536
        %v543 = vsel %vm541, %v540, 0.0
        %v544 = vsel %vm542, %v540, 0.0
        %v545 = vadd.f32 %v523, %v543
        %v546 = vadd.f32 %v524, %v544
        %v547 = vadd.f32 %v525, %v540
        %v548 = vld [vmem:[%s410] sm:$0xf]
        %v549 = vpack.c.bf16 %v546, %v545
        %vm550 = vcmask 130048
        %v552 = vsel %vm550, %v548, 0
        %554 = vmatprep.subr.bf16.mxu0 0
        %555 = vmatpush1.bf16.msra.mxu0 0
        %556 = vmatprep.subr.bf16.mxu0 0
        %557 = vmatpush1.bf16.msra.mxu0 0
        %558 = vmatprep.subr.bf16.mxu0 0
        %559 = vmatpush1.bf16.msra.mxu0 0
        %560 = vmatprep.subr.bf16.mxu0 0
        %561 = vmatpush1.bf16.msra.mxu0 0
        %562 = vmatprep.subr.bf16.mxu0 0
        %563 = vmatpush1.bf16.msra.mxu0 0
        %564 = vmatprep.subr.bf16.mxu0 0
        %565 = vmatpush1.bf16.msra.mxu0 0
        %566 = vmatprep.subr.bf16.mxu0 0
        %567 = vmatpush1.bf16.msra.mxu0 0
        %568 = vmatprep.subr.bf16.mxu0 0
        %569 = vmatpush1.bf16.msra.mxu0 %v549
        %570 = vmatprep.subr.bf16.mxu0 0
        %571 = vmatpush2.bf16.msra.mxu0 0
        %572 = vmatprep.subr.bf16.mxu0 0
        %573 = vmatpush2.bf16.msra.mxu0 0
        %574 = vmatprep.subr.bf16.mxu0 0
        %575 = vmatpush2.bf16.msra.mxu0 0
        %576 = vmatprep.subr.bf16.mxu0 0
        %577 = vmatpush2.bf16.msra.mxu0 0
        %578 = vmatprep.subr.bf16.mxu0 0
        %579 = vmatpush2.bf16.msra.mxu0 0
        %580 = vmatprep.subr.bf16.mxu0 0
        %581 = vmatpush2.bf16.msra.mxu0 0
        %582 = vmatprep.subr.bf16.mxu0 0
        %583 = vmatpush2.bf16.msra.mxu0 0
        %584 = vmatprep.subr.bf16.mxu0 0
        %585 = vmatpush2.bf16.msra.mxu0 0
        %586 = vmatprep.mubr.bf16.mxu0 0
        %587 = vmatmul.mubr.bf16.gmra.mxu0 %v552
        %v588 = vpop.f32.mrf.mxu0
        %v589 = vadd.f32 0.0, %v588
        %v590 = vpop.f32.mrf.mxu0
        %v591 = vpop.f32.mrf.mxu0
        %v592 = vpop.f32.mrf.mxu0
        %593 = vdwg.mxu0
        %v594 = vrcp.pop %v547
        %v595 = vmul.f32 %v589, %v594
        %v596 = vld [vmem:[%s4] sm:$0xf]
        %v597 = vld [vmem:[%s4 + $0x4] sm:$0xf]
        %v598 = vld [vmem:[%s4 + $0x8] sm:$0xf]
        %v599 = vld [vmem:[%s4 + $0xc] sm:$0xf]
        %v600 = vld [vmem:[%s5] sm:$0xf]
        %v601 = vld [vmem:[%s5 + $0x4] sm:$0xf]
        %v602 = vld [vmem:[%s5 + $0x8] sm:$0xf]
        %v603 = vld [vmem:[%s5 + $0xc] sm:$0xf]
        %v604 = vld [vmem:[%s6] sm:$0xff]
        %v605 = vld [vmem:[%s6 + $0x8] sm:$0xff]
        %v606 = vld [vmem:[%s6 + $0x10] sm:$0xff]
        %v607 = vld [vmem:[%s6 + $0x18] sm:$0xff]
        %v608 = vld [vmem:[%s417] sm:$0xf]
        %v609 = vpack.c.bf16 %v608, %v608
        %v610 = vpack.c.bf16 %v595, %v595
        %v615 = vunpack.c.l.b16 %v600
        %v616 = vunpack.c.l.b16 %v601
        %v617 = vunpack.c.l.b16 %v602
        %v618 = vunpack.c.l.b16 %v603
        %v619 = vpack.c.b16 %v616, %v615
        %v620 = vpack.c.b16 %v618, %v617
        %vm621 = vcmask 64512
        %v623 = vsel %vm621, %v619, 0
        %v626 = vsel %vm621, %v620, 0
        %vm628 = vcmask 1043456
        %v630 = vsel %vm628, %v610, 0
        %632 = vmatprep.subr.bf16.mxu0 0
        %633 = vmatpush1.bf16.msra.mxu0 0
        %634 = vmatprep.subr.bf16.mxu0 0
        %635 = vmatpush1.bf16.msra.mxu0 0
        %636 = vmatprep.subr.bf16.mxu0 0
        %637 = vmatpush1.bf16.msra.mxu0 0
        %638 = vmatprep.subr.bf16.mxu0 0
        %639 = vmatpush1.bf16.msra.mxu0 0
        %640 = vmatprep.subr.bf16.mxu0 0
        %641 = vmatpush1.bf16.msra.mxu0 0
        %642 = vmatprep.subr.bf16.mxu0 0
        %643 = vmatpush1.bf16.msra.mxu0 0
        %644 = vmatprep.subr.bf16.mxu0 0
        %645 = vmatpush1.bf16.msra.mxu0 0
        %646 = vmatprep.subr.bf16.mxu0 0
        %647 = vmatpush1.bf16.msra.mxu0 %v630
        %648 = vmatprep.subr.bf16.mxu0 0
        %649 = vmatpush2.bf16.msra.mxu0 0
        %650 = vmatprep.subr.bf16.mxu0 0
        %651 = vmatpush2.bf16.msra.mxu0 0
        %652 = vmatprep.subr.bf16.mxu0 0
        %653 = vmatpush2.bf16.msra.mxu0 0
        %654 = vmatprep.subr.bf16.mxu0 0
        %655 = vmatpush2.bf16.msra.mxu0 0
        %656 = vmatprep.subr.bf16.mxu0 0
        %657 = vmatpush2.bf16.msra.mxu0 0
        %658 = vmatprep.subr.bf16.mxu0 0
        %659 = vmatpush2.bf16.msra.mxu0 0
        %660 = vmatprep.subr.bf16.mxu0 0
        %661 = vmatpush2.bf16.msra.mxu0 0
        %662 = vmatprep.subr.bf16.mxu0 0
        %663 = vmatpush2.bf16.msra.mxu0 0
        %664 = vmatprep.mubr.bf16.mxu0 0
        %665 = vmatmul.mubr.bf16.gmra.mxu0 %v623
        %v666 = vpop.f32.mrf.mxu0
        %v667 = vadd.f32 0.0, %v666
        %v668 = vpop.f32.mrf.mxu0
        %v669 = vpop.f32.mrf.mxu0
        %v670 = vadd.f32 0.0, %v669
        %v671 = vpop.f32.mrf.mxu0
        %672 = vmatprep.mubr.bf16.mxu0 0
        %673 = vmatmul.mubr.bf16.gmra.mxu0 %v626
        %v674 = vpop.f32.mrf.mxu0
        %v675 = vadd.f32 0.0, %v674
        %v676 = vpop.f32.mrf.mxu0
        %v677 = vpop.f32.mrf.mxu0
        %v678 = vadd.f32 0.0, %v677
        %v679 = vpop.f32.mrf.mxu0
        %680 = vdwg.mxu0
        %v685 = vunpack.c.l.b16 %v596
        %v686 = vunpack.c.l.b16 %v597
        %v687 = vunpack.c.l.b16 %v598
        %v688 = vunpack.c.l.b16 %v599
        %v689 = vpack.c.b16 %v686, %v685
        %v690 = vpack.c.b16 %v688, %v687
        %vm691 = vcmask 31744
        %v693 = vsel %vm691, %v689, 0
        %v696 = vsel %vm691, %v690, 0
        %vm698 = vcmask 1041408
        %v700 = vsel %vm698, %v609, 0
        %702 = vmatprep.subr.bf16.mxu0 0
        %703 = vmatpush1.bf16.msra.mxu0 0
        %704 = vmatprep.subr.bf16.mxu0 0
        %705 = vmatpush1.bf16.msra.mxu0 0
        %706 = vmatprep.subr.bf16.mxu0 0
        %707 = vmatpush1.bf16.msra.mxu0 0
        %708 = vmatprep.subr.bf16.mxu0 0
        %709 = vmatpush1.bf16.msra.mxu0 0
        %710 = vmatprep.subr.bf16.mxu0 0
        %711 = vmatpush1.bf16.msra.mxu0 0
        %712 = vmatprep.subr.bf16.mxu0 0
        %713 = vmatpush1.bf16.msra.mxu0 0
        %714 = vmatprep.subr.bf16.mxu0 0
        %715 = vmatpush1.bf16.msra.mxu0 0
        %716 = vmatprep.subr.bf16.mxu0 0
        %717 = vmatpush1.bf16.msra.mxu0 %v700
        %718 = vmatprep.subr.bf16.mxu0 0
        %719 = vmatpush2.bf16.msra.mxu0 0
        %720 = vmatprep.subr.bf16.mxu0 0
        %721 = vmatpush2.bf16.msra.mxu0 0
        %722 = vmatprep.subr.bf16.mxu0 0
        %723 = vmatpush2.bf16.msra.mxu0 0
        %724 = vmatprep.subr.bf16.mxu0 0
        %725 = vmatpush2.bf16.msra.mxu0 0
        %726 = vmatprep.subr.bf16.mxu0 0
        %727 = vmatpush2.bf16.msra.mxu0 0
        %728 = vmatprep.subr.bf16.mxu0 0
        %729 = vmatpush2.bf16.msra.mxu0 0
        %730 = vmatprep.subr.bf16.mxu0 0
        %731 = vmatpush2.bf16.msra.mxu0 0
        %732 = vmatprep.subr.bf16.mxu0 0
        %733 = vmatpush2.bf16.msra.mxu0 0
        %734 = vmatprep.mubr.bf16.mxu0 0
        %735 = vmatmul.mubr.bf16.gmra.mxu0 %v693
        %v736 = vpop.f32.mrf.mxu0
        %v737 = vadd.f32 %v667, %v736
        %v738 = vpop.f32.mrf.mxu0
        %v739 = vpop.f32.mrf.mxu0
        %v740 = vadd.f32 %v670, %v739
        %v741 = vpop.f32.mrf.mxu0
        %742 = vmatprep.mubr.bf16.mxu0 0
        %743 = vmatmul.mubr.bf16.gmra.mxu0 %v696
        %v744 = vpop.f32.mrf.mxu0
        %v745 = vadd.f32 %v675, %v744
        %v746 = vpop.f32.mrf.mxu0
        %v747 = vpop.f32.mrf.mxu0
        %v748 = vadd.f32 %v678, %v747
        %v749 = vpop.f32.mrf.mxu0
        %750 = vdwg.mxu0
        %752 = vset.pattern.permute.xlu0 0
        %753 = vperm.xlu0 %752, %v604
        %v754 = vpop.permute.xlu0 %753
        %757 = vset.pattern.permute.xlu0 0
        %758 = vperm.xlu0 %757, %v605
        %v759 = vpop.permute.xlu0 %758
        %762 = vset.pattern.permute.xlu0 0
        %763 = vperm.xlu0 %762, %v606
        %v764 = vpop.permute.xlu0 %763
        %767 = vset.pattern.permute.xlu0 0
        %768 = vperm.xlu0 %767, %v607
        %v769 = vpop.permute.xlu0 %768
        %v771 = vadd.f32 %v737, %v754
        %v772 = vadd.f32 %v740, %v759
        %v773 = vadd.f32 %v745, %v764
        %v774 = vadd.f32 %v748, %v769
        %v775 = vmax.f32 %v771, 0.0
        %v776 = vmax.f32 %v772, 0.0
        %v777 = vmax.f32 %v773, 0.0
        %v778 = vmax.f32 %v774, 0.0
        %v779 = vld [vmem:[%s7] sm:$0xf]
        %v780 = vld [vmem:[%s7 + $0x4] sm:$0xf]
        %v781 = vld [vmem:[%s8] sm:$0xff]
        %v782 = vld [vmem:[%s8 + $0x8] sm:$0xff]
        %v783 = vpack.c.bf16 %v776, %v775
        %v784 = vpack.c.bf16 %v778, %v777
        %786 = vset.pattern.permute.xlu0 0
        %787 = vperm.xlu0 %786, %v781
        %v788 = vpop.permute.xlu0 %787
        %791 = vset.pattern.permute.xlu0 0
        %792 = vperm.xlu0 %791, %v782
        %v793 = vpop.permute.xlu0 %792
        %v797 = vunpack.c.l.b16 %v779
        %v798 = vunpack.c.l.b16 %v780
        %v799 = vpack.c.b16 %v798, %v797
        %vm800 = vcmask 261120
        %v802 = vsel %vm800, %v799, 0
        %804 = vmatprep.subr.bf16.mxu0 0
        %805 = vmatpush1.bf16.msra.mxu0 0
        %806 = vmatprep.subr.bf16.mxu0 0
        %807 = vmatpush1.bf16.msra.mxu0 0
        %808 = vmatprep.subr.bf16.mxu0 0
        %809 = vmatpush1.bf16.msra.mxu0 0
        %810 = vmatprep.subr.bf16.mxu0 0
        %811 = vmatpush1.bf16.msra.mxu0 0
        %812 = vmatprep.subr.bf16.mxu0 0
        %813 = vmatpush1.bf16.msra.mxu0 0
        %814 = vmatprep.subr.bf16.mxu0 0
        %815 = vmatpush1.bf16.msra.mxu0 0
        %816 = vmatprep.subr.bf16.mxu0 0
        %817 = vmatpush1.bf16.msra.mxu0 %v784
        %818 = vmatprep.subr.bf16.mxu0 0
        %819 = vmatpush1.bf16.msra.mxu0 %v783
        %820 = vmatprep.subr.bf16.mxu0 0
        %821 = vmatpush2.bf16.msra.mxu0 0
        %822 = vmatprep.subr.bf16.mxu0 0
        %823 = vmatpush2.bf16.msra.mxu0 0
        %824 = vmatprep.subr.bf16.mxu0 0
        %825 = vmatpush2.bf16.msra.mxu0 0
        %826 = vmatprep.subr.bf16.mxu0 0
        %827 = vmatpush2.bf16.msra.mxu0 0
        %828 = vmatprep.subr.bf16.mxu0 0
        %829 = vmatpush2.bf16.msra.mxu0 0
        %830 = vmatprep.subr.bf16.mxu0 0
        %831 = vmatpush2.bf16.msra.mxu0 0
        %832 = vmatprep.subr.bf16.mxu0 0
        %833 = vmatpush2.bf16.msra.mxu0 0
        %834 = vmatprep.subr.bf16.mxu0 0
        %835 = vmatpush2.bf16.msra.mxu0 0
        %836 = vmatprep.mubr.bf16.mxu0 0
        %837 = vmatmul.mubr.bf16.gmra.mxu0 %v802
        %v838 = vpop.f32.mrf.mxu0
        %v839 = vadd.f32 %v788, %v838
        %v840 = vpop.f32.mrf.mxu0
        %v841 = vpop.f32.mrf.mxu0
        %v842 = vadd.f32 %v793, %v841
        %v843 = vpop.f32.mrf.mxu0
        %844 = vdwg.mxu0
        %v845 = vmax.f32 %v839, 0.0
        %v846 = vmax.f32 %v842, 0.0
        %847 = vst [vmem:[%s394] sm:$0xff] %v845
        %848 = vst [vmem:[%s394 + $0x8] sm:$0xff] %v846
        %s849 = sand.u32 %s258, 1
        %s850 = scalar_lea.sflag [#allocation3], %s849
        %s851 = sand.u32 %s258, 1
        %s852 = smul.addr %s851, 16
        %s853 = scalar_lea.vmem [#allocation2], %s852
        // Predicated region
        $region57: #{tpu_custom_call.1} parent=55 // pred_check
          %p854 = pneg %p268
        $region58: #{tpu_custom_call.1} parent=55 // pred_check_branch
          %856 = sbr.rel (%p854) target = $region60
        $region59: #{tpu_custom_call.1} parent=55 // pred_region
          %s858 = ssub.s32 256, 256
          %859 = vsyncadd %s850, %s858
          %s860 = smul.addr %s27, 2
          %s861 = sadd.s32 %s28, %s860
          %s862 = smul.addr %s861, 128
          %s863 = scalar_lea.hbm %s9, %s862
          %s864 = sshll.u32 %s853, 4
          %s865 = int_to_ptr.vmem [resolvable:$true] %s864
          %870 = dma.vmem_to_hbm [thread:$0]  %s865, 256, %s863, %s850, 128, 128, 8
        $region60: #{tpu_custom_call.1} parent=55 // pred_fallthru
          _
      $region56: #{tpu_custom_call.1} parent=5 // pred_fallthru
        _
      %p871 = scmp.le.s32.totalorder 2, %s18
      // Predicated region
      $region61: #{tpu_custom_call.1} parent=5 // pred_check
        %p872 = pneg %p871
      $region62: #{tpu_custom_call.1} parent=5 // pred_check_branch
        %874 = sbr.rel (%p872) target = $region64
      $region63: #{tpu_custom_call.1} parent=5 // pred_region
        %s875 = ssub.s32 %s18, 2
        // Predicated region
        $region65: #{tpu_custom_call.1} parent=63 // pred_check
          %p876 = pneg %p274
        $region66: #{tpu_custom_call.1} parent=63 // pred_check_branch
          %878 = sbr.rel (%p876) target = $region68
        $region67: #{tpu_custom_call.1} parent=63 // pred_region
          %s879 = sand.u32 %s259, 1
          %s880 = scalar_lea.sflag [#allocation3], %s879
          %s881 = sand.u32 %s259, 1
          %s882 = smul.addr %s881, 16
          %s883 = scalar_lea.vmem [#allocation2], %s882
          %884 = dma.done %s880, 256
        $region68: #{tpu_custom_call.1} parent=63 // pred_fallthru
          _
      $region64: #{tpu_custom_call.1} parent=5 // pred_fallthru
        _
    $region6: #{tpu_custom_call.1} parent=1 // loop_footer
      %s22 = sadd.s32 1, %s18
    $region7: #{tpu_custom_call.1} parent=1 // loop_footer_branch
      %17 = sbr.rel target = $region3
    $region8: #{tpu_custom_call.1} parent=1 // loop_exit
      _
    %885 = vsyncpa [#allocation3], 1
    %s886 = scalar_lea.sflag [#allocation3], 1
    %887 = vsyncpa %s886, 1

// kernel: tpu_custom_call.1
$region0: #{tpu_custom_call.1}
  #allocation0 [shape = 'u32[]', space=smem, size = 0x4, offset = 0x4, fixed_abs, tag = 'smem constant byte address 0x4 - core index']
  #allocation1 [shape = 'u32[144,128]{1,0:T(1,128)}', space=vmem, size = 0x12000, scoped, tag = 'internal scratch']
  %s0 = inlined_call_operand.vmem [shape: f32[2,3,128], index: 0, kind: input, shape index: {}]
  %s1 = inlined_call_operand.vmem [shape: f32[2,16,3], index: 1, kind: input, shape index: {}]
  %s2 = inlined_call_operand.vmem [shape: bf16[2,8,16], index: 2, kind: input, shape index: {}]
  %s3 = inlined_call_operand.vmem [shape: f32[2,4,128], index: 3, kind: input, shape index: {}]
  %s4 = inlined_call_operand.vmem [shape: bf16[32,4], index: 4, kind: input, shape index: {}]
  %s5 = inlined_call_operand.vmem [shape: bf16[32,8], index: 5, kind: input, shape index: {}]
  %s6 = inlined_call_operand.vmem [shape: f32[32,1], index: 6, kind: input, shape index: {}]
  %s7 = inlined_call_operand.vmem [shape: bf16[16,32], index: 7, kind: input, shape index: {}]
  %s8 = inlined_call_operand.vmem [shape: f32[16,1], index: 8, kind: input, shape index: {}]
  %s9 = inlined_call_operand.hbm [shape: f32[2,16,128], index: 9, kind: output, shape index: {}]
  %s10 = sld [smem:[#allocation0]]
  $region69: #{tpu_custom_call.1} parent=0
    _
  %s12 = ssub.s32 1, %s10
  %s13 = scalar_select 0, %s12, %s10
  $region1: #{tpu_custom_call.1} parent=0
    #allocation2 [shape = 'u8[16384]{0}', space=vmem, size = 0x4000, scoped, tag = 'output window, operand 0']
    #allocation3 [shape = 's32[2]{0}', space=sflag, size = 0x8, scoped, tag = 'scoped memory for tpu_custom_call.1']
    %14 = vsyncpa [#allocation3], 0
    %s15 = scalar_lea.sflag [#allocation3], 1
    %16 = vsyncpa %s15, 0
    loop: start=0, step=1, limit=4
    $region2: #{tpu_custom_call.1} parent=1 // loop_pre_header
      _
    $region3: #{tpu_custom_call.1} parent=1 // loop_header
      %s18 = sphi 0, %s22
      %p19 = scmp.ge.s32.totalorder %s18, 4
      %s25 = sphi 0, %s37
      %s26 = sphi 0, %s33
      %s27 = sphi 0, %s25
      %s28 = sphi 0, %s26
      %s29 = sphi 0, %s27
      %s30 = sphi 0, %s28
      %s42 = sphi 0, %s44
      %s45 = sphi 0, %s42
      %s46 = sphi 0, %s45
      %s62 = sphi 0, %s46
      %s68 = sphi 0, %s70
      %s71 = sphi 0, %s68
      %s72 = sphi 0, %s71
      %s88 = sphi 0, %s72
      %s94 = sphi 0, %s96
      %s97 = sphi 0, %s94
      %s98 = sphi 0, %s97
      %s114 = sphi 0, %s98
      %s122 = sphi 0, %s124
      %s125 = sphi 0, %s122
      %s126 = sphi 0, %s125
      %s142 = sphi 0, %s126
      %s146 = sphi 0, %s146
      %s148 = sphi 0, %s146
      %s149 = sphi 0, %s148
      %s163 = sphi 0, %s149
      %s167 = sphi 0, %s167
      %s169 = sphi 0, %s167
      %s170 = sphi 0, %s169
      %s184 = sphi 0, %s170
      %s188 = sphi 0, %s188
      %s190 = sphi 0, %s188
      %s191 = sphi 0, %s190
      %s205 = sphi 0, %s191
      %s209 = sphi 0, %s209
      %s211 = sphi 0, %s209
      %s212 = sphi 0, %s211
      %s226 = sphi 0, %s212
      %s230 = sphi 0, %s230
      %s232 = sphi 0, %s230
      %s233 = sphi 0, %s232
      %s247 = sphi 0, %s233
      %s255 = sphi 0, %s257
      %s258 = sphi 0, %s255
      %s259 = sphi 0, %s258
      %s275 = sphi 0, %s259
    $region4: #{tpu_custom_call.1} parent=1 // loop_header_branch
      %21 = sbr.rel (%p19) target = $region8
    $region5: #{tpu_custom_call.1} parent=1 // loop_body
      %s23 = ssub.s32 %s18, 1
      %s24 = ssub.s32 %s18, 2
      %s31 = sadd.s32 1, %s26
      %p32 = scmp.ge.s32.totalorder %s31, 1
      %s33 = scalar_select %p32, 0, %s31
      %s34 = sadd.s32 1, %s25
      %s35 = scalar_select %p32, %s34, %s25
      %p36 = scmp.ge.s32.totalorder %s35, 2
      %s37 = scalar_select %p36, 0, %s35
      %s38 = ssub.s32 %s25, %s37
      %s39 = ssub.s32 %s26, %s33
      %s40 = sor.u32 %s38, %s39
      %p41 = scmp.eq.s32.totalorder %s40, 0
      %s43 = sadd.s32 %s42, 1
      %s44 = scalar_select %p41, %s42, %s43
      %p47 = pneg %p41
      %p48 = scmp.eq.s32.totalorder %s18, 1
      %p49 = por %p47, %p48
      %p50 = scmp.ne.s32.totalorder %s42, %s45
      %p51 = scmp.eq.s32.totalorder %s18, 0
      %p52 = por %p50, %p51
      %p53 = scmp.ne.s32.totalorder %s42, %s45
      %p54 = scmp.eq.s32.totalorder %s23, 1
      %p55 = por %p53, %p54
      %p56 = scmp.ne.s32.totalorder %s45, %s46
      %p57 = scmp.eq.s32.totalorder %s23, 0
      %p58 = por %p56, %p57
      %p59 = scmp.ne.s32.totalorder %s45, %s46
      %p60 = scmp.eq.s32.totalorder %s24, 1
      %p61 = por %p59, %p60
      %p63 = scmp.ne.s32.totalorder %s46, %s62
      %p64 = scmp.eq.s32.totalorder %s24, 0
      %p65 = por %p63, %p64
      %s66 = ssub.s32 %s25, %s37
      %p67 = scmp.eq.s32.totalorder %s66, 0
      %s69 = sadd.s32 %s68, 1
      %s70 = scalar_select %p67, %s68, %s69
      %p73 = pneg %p67
      %p74 = scmp.eq.s32.totalorder %s18, 1
      %p75 = por %p73, %p74
      %p76 = scmp.ne.s32.totalorder %s68, %s71
      %p77 = scmp.eq.s32.totalorder %s18, 0
      %p78 = por %p76, %p77
      %p79 = scmp.ne.s32.totalorder %s68, %s71
      %p80 = scmp.eq.s32.totalorder %s23, 1
      %p81 = por %p79, %p80
      %p82 = scmp.ne.s32.totalorder %s71, %s72
      %p83 = scmp.eq.s32.totalorder %s23, 0
      %p84 = por %p82, %p83
      %p85 = scmp.ne.s32.totalorder %s71, %s72
      %p86 = scmp.eq.s32.totalorder %s24, 1
      %p87 = por %p85, %p86
      %p89 = scmp.ne.s32.totalorder %s72, %s88
      %p90 = scmp.eq.s32.totalorder %s24, 0
      %p91 = por %p89, %p90
      %s92 = ssub.s32 %s25, %s37
      %p93 = scmp.eq.s32.totalorder %s92, 0
      %s95 = sadd.s32 %s94, 1
      %s96 = scalar_select %p93, %s94, %s95
      %p99 = pneg %p93
      %p100 = scmp.eq.s32.totalorder %s18, 1
      %p101 = por %p99, %p100
      %p102 = scmp.ne.s32.totalorder %s94, %s97
      %p103 = scmp.eq.s32.totalorder %s18, 0
      %p104 = por %p102, %p103
      %p105 = scmp.ne.s32.totalorder %s94, %s97
      %p106 = scmp.eq.s32.totalorder %s23, 1
      %p107 = por %p105, %p106
      %p108 = scmp.ne.s32.totalorder %s97, %s98
      %p109 = scmp.eq.s32.totalorder %s23, 0
      %p110 = por %p108, %p109
      %p111 = scmp.ne.s32.totalorder %s97, %s98
      %p112 = scmp.eq.s32.totalorder %s24, 1
      %p113 = por %p111, %p112
      %p115 = scmp.ne.s32.totalorder %s98, %s114
      %p116 = scmp.eq.s32.totalorder %s24, 0
      %p117 = por %p115, %p116
      %s118 = ssub.s32 %s25, %s37
      %s119 = ssub.s32 %s26, %s33
      %s120 = sor.u32 %s118, %s119
      %p121 = scmp.eq.s32.totalorder %s120, 0
      %s123 = sadd.s32 %s122, 1
      %s124 = scalar_select %p121, %s122, %s123
      %p127 = pneg %p121
      %p128 = scmp.eq.s32.totalorder %s18, 1
      %p129 = por %p127, %p128
      %p130 = scmp.ne.s32.totalorder %s122, %s125
      %p131 = scmp.eq.s32.totalorder %s18, 0
      %p132 = por %p130, %p131
      %p133 = scmp.ne.s32.totalorder %s122, %s125
      %p134 = scmp.eq.s32.totalorder %s23, 1
      %p135 = por %p133, %p134
      %p136 = scmp.ne.s32.totalorder %s125, %s126
      %p137 = scmp.eq.s32.totalorder %s23, 0
      %p138 = por %p136, %p137
      %p139 = scmp.ne.s32.totalorder %s125, %s126
      %p140 = scmp.eq.s32.totalorder %s24, 1
      %p141 = por %p139, %p140
      %p143 = scmp.ne.s32.totalorder %s126, %s142
      %p144 = scmp.eq.s32.totalorder %s24, 0
      %p145 = por %p143, %p144
      %s147 = sadd.s32 %s146, 1
      %p150 = scmp.eq.s32.totalorder %s18, 1
      %p151 = scmp.ne.s32.totalorder %s146, %s148
      %p152 = scmp.eq.s32.totalorder %s18, 0
      %p153 = por %p151, %p152
      %p154 = scmp.ne.s32.totalorder %s146, %s148
      %p155 = scmp.eq.s32.totalorder %s23, 1
      %p156 = por %p154, %p155
      %p157 = scmp.ne.s32.totalorder %s148, %s149
      %p158 = scmp.eq.s32.totalorder %s23, 0
      %p159 = por %p157, %p158
      %p160 = scmp.ne.s32.totalorder %s148, %s149
      %p161 = scmp.eq.s32.totalorder %s24, 1
      %p162 = por %p160, %p161
      %p164 = scmp.ne.s32.totalorder %s149, %s163
      %p165 = scmp.eq.s32.totalorder %s24, 0
      %p166 = por %p164, %p165
      %s168 = sadd.s32 %s167, 1
      %p171 = scmp.eq.s32.totalorder %s18, 1
      %p172 = scmp.ne.s32.totalorder %s167, %s169
      %p173 = scmp.eq.s32.totalorder %s18, 0
      %p174 = por %p172, %p173
      %p175 = scmp.ne.s32.totalorder %s167, %s169
      %p176 = scmp.eq.s32.totalorder %s23, 1
      %p177 = por %p175, %p176
      %p178 = scmp.ne.s32.totalorder %s169, %s170
      %p179 = scmp.eq.s32.totalorder %s23, 0
      %p180 = por %p178, %p179
      %p181 = scmp.ne.s32.totalorder %s169, %s170
      %p182 = scmp.eq.s32.totalorder %s24, 1
      %p183 = por %p181, %p182
      %p185 = scmp.ne.s32.totalorder %s170, %s184
      %p186 = scmp.eq.s32.totalorder %s24, 0
      %p187 = por %p185, %p186
      %s189 = sadd.s32 %s188, 1
      %p192 = scmp.eq.s32.totalorder %s18, 1
      %p193 = scmp.ne.s32.totalorder %s188, %s190
      %p194 = scmp.eq.s32.totalorder %s18, 0
      %p195 = por %p193, %p194
      %p196 = scmp.ne.s32.totalorder %s188, %s190
      %p197 = scmp.eq.s32.totalorder %s23, 1
      %p198 = por %p196, %p197
      %p199 = scmp.ne.s32.totalorder %s190, %s191
      %p200 = scmp.eq.s32.totalorder %s23, 0
      %p201 = por %p199, %p200
      %p202 = scmp.ne.s32.totalorder %s190, %s191
      %p203 = scmp.eq.s32.totalorder %s24, 1
      %p204 = por %p202, %p203
      %p206 = scmp.ne.s32.totalorder %s191, %s205
      %p207 = scmp.eq.s32.totalorder %s24, 0
      %p208 = por %p206, %p207
      %s210 = sadd.s32 %s209, 1
      %p213 = scmp.eq.s32.totalorder %s18, 1
      %p214 = scmp.ne.s32.totalorder %s209, %s211
      %p215 = scmp.eq.s32.totalorder %s18, 0
      %p216 = por %p214, %p215
      %p217 = scmp.ne.s32.totalorder %s209, %s211
      %p218 = scmp.eq.s32.totalorder %s23, 1
      %p219 = por %p217, %p218
      %p220 = scmp.ne.s32.totalorder %s211, %s212
      %p221 = scmp.eq.s32.totalorder %s23, 0
      %p222 = por %p220, %p221
      %p223 = scmp.ne.s32.totalorder %s211, %s212
      %p224 = scmp.eq.s32.totalorder %s24, 1
      %p225 = por %p223, %p224
      %p227 = scmp.ne.s32.totalorder %s212, %s226
      %p228 = scmp.eq.s32.totalorder %s24, 0
      %p229 = por %p227, %p228
      %s231 = sadd.s32 %s230, 1
      %p234 = scmp.eq.s32.totalorder %s18, 1
      %p235 = scmp.ne.s32.totalorder %s230, %s232
      %p236 = scmp.eq.s32.totalorder %s18, 0
      %p237 = por %p235, %p236
      %p238 = scmp.ne.s32.totalorder %s230, %s232
      %p239 = scmp.eq.s32.totalorder %s23, 1
      %p240 = por %p238, %p239
      %p241 = scmp.ne.s32.totalorder %s232, %s233
      %p242 = scmp.eq.s32.totalorder %s23, 0
      %p243 = por %p241, %p242
      %p244 = scmp.ne.s32.totalorder %s232, %s233
      %p245 = scmp.eq.s32.totalorder %s24, 1
      %p246 = por %p244, %p245
      %p248 = scmp.ne.s32.totalorder %s233, %s247
      %p249 = scmp.eq.s32.totalorder %s24, 0
      %p250 = por %p248, %p249
      %s251 = ssub.s32 %s25, %s37
      %s252 = ssub.s32 %s26, %s33
      %s253 = sor.u32 %s251, %s252
      %p254 = scmp.eq.s32.totalorder %s253, 0
      %s256 = sadd.s32 %s255, 1
      %s257 = scalar_select %p254, %s255, %s256
      %p260 = pneg %p254
      %p261 = scmp.eq.s32.totalorder %s18, 1
      %p262 = por %p260, %p261
      %p263 = scmp.ne.s32.totalorder %s255, %s258
      %p264 = scmp.eq.s32.totalorder %s18, 0
      %p265 = por %p263, %p264
      %p266 = scmp.ne.s32.totalorder %s255, %s258
      %p267 = scmp.eq.s32.totalorder %s23, 1
      %p268 = por %p266, %p267
      %p269 = scmp.ne.s32.totalorder %s258, %s259
      %p270 = scmp.eq.s32.totalorder %s23, 0
      %p271 = por %p269, %p270
      %p272 = scmp.ne.s32.totalorder %s258, %s259
      %p273 = scmp.eq.s32.totalorder %s24, 1
      %p274 = por %p272, %p273
      %p276 = scmp.ne.s32.totalorder %s259, %s275
      %p277 = scmp.eq.s32.totalorder %s24, 0
      %p278 = por %p276, %p277
      %p279 = scmp.le.s32.totalorder 1, %s18
      %p280 = scmp.lt.s32.totalorder %s18, 3
      %p281 = pnand %p279, %p280
      %p282 = pneg %p281
      // Predicated region
      $region9: #{tpu_custom_call.1} parent=5 // pred_check
        _
      $region10: #{tpu_custom_call.1} parent=5 // pred_check_branch
        %284 = sbr.rel (%p281) target = $region12
      $region11: #{tpu_custom_call.1} parent=5 // pred_region
        %s285 = ssub.s32 %s18, 1
        // Predicated region
        $region13: #{tpu_custom_call.1} parent=11 // pred_check
          %p286 = pneg %p159
        $region14: #{tpu_custom_call.1} parent=11 // pred_check_branch
          %288 = sbr.rel (%p286) target = $region16
        $region15: #{tpu_custom_call.1} parent=11 // pred_region
          _
        $region16: #{tpu_custom_call.1} parent=11 // pred_fallthru
          _
        // Predicated region
        $region17: #{tpu_custom_call.1} parent=11 // pred_check
          %p289 = pneg %p180
        $region18: #{tpu_custom_call.1} parent=11 // pred_check_branch
          %291 = sbr.rel (%p289) target = $region20
        $region19: #{tpu_custom_call.1} parent=11 // pred_region
          _
        $region20: #{tpu_custom_call.1} parent=11 // pred_fallthru
          _
        // Predicated region
        $region21: #{tpu_custom_call.1} parent=11 // pred_check
          %p292 = pneg %p201
        $region22: #{tpu_custom_call.1} parent=11 // pred_check_branch
          %294 = sbr.rel (%p292) target = $region24
        $region23: #{tpu_custom_call.1} parent=11 // pred_region
          _
        $region24: #{tpu_custom_call.1} parent=11 // pred_fallthru
          _
        // Predicated region
        $region25: #{tpu_custom_call.1} parent=11 // pred_check
          %p295 = pneg %p222
        $region26: #{tpu_custom_call.1} parent=11 // pred_check_branch
          %297 = sbr.rel (%p295) target = $region28
        $region27: #{tpu_custom_call.1} parent=11 // pred_region
          _
        $region28: #{tpu_custom_call.1} parent=11 // pred_fallthru
          _
        // Predicated region
        $region29: #{tpu_custom_call.1} parent=11 // pred_check
          %p298 = pneg %p243
        $region30: #{tpu_custom_call.1} parent=11 // pred_check_branch
          %300 = sbr.rel (%p298) target = $region32
        $region31: #{tpu_custom_call.1} parent=11 // pred_region
          _
        $region32: #{tpu_custom_call.1} parent=11 // pred_fallthru
          _
      $region12: #{tpu_custom_call.1} parent=5 // pred_fallthru
        _
      %p301 = scmp.lt.s32.totalorder %s18, 2
      // Predicated region
      $region33: #{tpu_custom_call.1} parent=5 // pred_check
        %p302 = pneg %p301
      $region34: #{tpu_custom_call.1} parent=5 // pred_check_branch
        %304 = sbr.rel (%p302) target = $region36
      $region35: #{tpu_custom_call.1} parent=5 // pred_region
        // Predicated region
        $region37: #{tpu_custom_call.1} parent=35 // pred_check
          %p305 = pneg %p52
        $region38: #{tpu_custom_call.1} parent=35 // pred_check_branch
          %307 = sbr.rel (%p305) target = $region40
        $region39: #{tpu_custom_call.1} parent=35 // pred_region
          %p308 = scmp.lt.s32.totalorder %s25, 1
          %s309 = scalar_select %p308, %s25, 1
          %p310 = scmp.lt.s32.totalorder %s26, 0
          %s311 = scalar_select %p310, %s26, 0
          %s312 = sadd.s32 %s311, %s309
          %s313 = smul.addr %s312, 4
          %s314 = scalar_lea.vmem %s0, %s313
        $region40: #{tpu_custom_call.1} parent=35 // pred_fallthru
          _
        // Predicated region
        $region41: #{tpu_custom_call.1} parent=35 // pred_check
          %p315 = pneg %p78
        $region42: #{tpu_custom_call.1} parent=35 // pred_check_branch
          %317 = sbr.rel (%p315) target = $region44
        $region43: #{tpu_custom_call.1} parent=35 // pred_region
          %p318 = scmp.lt.s32.totalorder %s25, 1
          %s319 = scalar_select %p318, %s25, 1
          %s320 = smul.addr %s319, 2
          %s321 = smul.addr %s320, 8
          %s322 = scalar_lea.vmem %s1, %s321
        $region44: #{tpu_custom_call.1} parent=35 // pred_fallthru
          _
        // Predicated region
        $region45: #{tpu_custom_call.1} parent=35 // pred_check
          %p323 = pneg %p104
        $region46: #{tpu_custom_call.1} parent=35 // pred_check_branch
          %325 = sbr.rel (%p323) target = $region48
        $region47: #{tpu_custom_call.1} parent=35 // pred_region
          %p326 = scmp.lt.s32.totalorder %s25, 1
          %s327 = scalar_select %p326, %s25, 1
          %s328 = smul.addr %s327, 4
          %s329 = scalar_lea.vmem %s2, %s328
        $region48: #{tpu_custom_call.1} parent=35 // pred_fallthru
          _
        // Predicated region
        $region49: #{tpu_custom_call.1} parent=35 // pred_check
          %p330 = pneg %p132
        $region50: #{tpu_custom_call.1} parent=35 // pred_check_branch
          %332 = sbr.rel (%p330) target = $region52
        $region51: #{tpu_custom_call.1} parent=35 // pred_region
          %p333 = scmp.lt.s32.totalorder %s25, 1
          %s334 = scalar_select %p333, %s25, 1
          %p335 = scmp.lt.s32.totalorder %s26, 0
          %s336 = scalar_select %p335, %s26, 0
          %s337 = sadd.s32 %s336, %s334
          %s338 = smul.addr %s337, 4
          %s339 = scalar_lea.vmem %s3, %s338
        $region52: #{tpu_custom_call.1} parent=35 // pred_fallthru
          _
      $region36: #{tpu_custom_call.1} parent=5 // pred_fallthru
        _
      %p340 = scmp.le.s32.totalorder 1, %s18
      %p341 = scmp.lt.s32.totalorder %s18, 3
      %p342 = pnand %p340, %p341
      %p343 = pneg %p342
      // Predicated region
      $region53: #{tpu_custom_call.1} parent=5 // pred_check
        _
      $region54: #{tpu_custom_call.1} parent=5 // pred_check_branch
        %345 = sbr.rel (%p342) target = $region56
      $region55: #{tpu_custom_call.1} parent=5 // pred_region
        %s346 = ssub.s32 %s18, 1
        %p347 = scmp.lt.s32.totalorder %s27, 1
        %s348 = scalar_select %p347, %s27, 1
        %p349 = scmp.lt.s32.totalorder %s28, 0
        %s350 = scalar_select %p349, %s28, 0
        %s351 = sadd.s32 %s350, %s348
        %s352 = smul.addr %s351, 4
        %s353 = scalar_lea.vmem %s0, %s352
        %p354 = pneg %p58
        %p355 = pneg %p55
        %p356 = scmp.lt.s32.totalorder %s27, 1
        %s357 = scalar_select %p356, %s27, 1
        %s358 = smul.addr %s357, 2
        %s359 = smul.addr %s358, 8
        %s360 = scalar_lea.vmem %s1, %s359
        %p361 = pneg %p84
        %p362 = pneg %p81
        %p363 = scmp.lt.s32.totalorder %s27, 1
        %s364 = scalar_select %p363, %s27, 1
        %s365 = smul.addr %s364, 4
        %s366 = scalar_lea.vmem %s2, %s365
        %p367 = pneg %p110
        %p368 = pneg %p107
        %p369 = scmp.lt.s32.totalorder %s27, 1
        %s370 = scalar_select %p369, %s27, 1
        %p371 = scmp.lt.s32.totalorder %s28, 0
        %s372 = scalar_select %p371, %s28, 0
        %s373 = sadd.s32 %s372, %s370
        %s374 = smul.addr %s373, 4
        %s375 = scalar_lea.vmem %s3, %s374
        %p376 = pneg %p138
        %p377 = pneg %p135
        %p378 = pneg %p159
        %p379 = pneg %p156
        %p380 = pneg %p180
        %p381 = pneg %p177
        %p382 = pneg %p201
        %p383 = pneg %p198
        %p384 = pneg %p222
        %p385 = pneg %p219
        %p386 = pneg %p243
        %p387 = pneg %p240
        %p388 = pneg %p271
        %p389 = pneg %p268
        %s390 = sand.u32 %s258, 1
        %s391 = scalar_lea.sflag [#allocation3], %s390
        %s392 = sand.u32 %s258, 1
        %s393 = smul.addr %s392, 16
        %s394 = scalar_lea.vmem [#allocation2], %s393
        %p395 = scmp.lt.s32.totalorder %s27, 1
        %s396 = scalar_select %p395, %s27, 1
        %p397 = scmp.lt.s32.totalorder %s28, 0
        %s398 = scalar_select %p397, %s28, 0
        %s399 = sadd.s32 %s398, %s396
        %s400 = smul.addr %s399, 4
        %s401 = scalar_lea.vmem %s0, %s400
        %p402 = scmp.lt.s32.totalorder %s27, 1
        %s403 = scalar_select %p402, %s27, 1
        %s404 = smul.addr %s403, 2
        %s405 = smul.addr %s404, 8
        %s406 = scalar_lea.vmem %s1, %s405
        %p407 = scmp.lt.s32.totalorder %s27, 1
        %s408 = scalar_select %p407, %s27, 1
        %s409 = smul.addr %s408, 4
        %s410 = scalar_lea.vmem %s2, %s409
        %p411 = scmp.lt.s32.totalorder %s27, 1
        %s412 = scalar_select %p411, %s27, 1
        %p413 = scmp.lt.s32.totalorder %s28, 0
        %s414 = scalar_select %p413, %s28, 0
        %s415 = sadd.s32 %s414, %s412
        %s416 = smul.addr %s415, 4
        %s417 = scalar_lea.vmem %s3, %s416
        %v419 = vld [vmem:[%s401] sm:$0x7]
        %v420 = vld [vmem:[%s406] sm:$0xff]
        %v421 = vld [vmem:[%s406 + $0x8] sm:$0xff]
        %423 = vset.pattern.permute.xlu0 0
        %424 = vperm.xlu0 %423, %v420
        %v425 = vpop.permute.xlu0 %424
        %428 = vset.pattern.permute.xlu0 0
        %429 = vperm.xlu0 %428, %v421
        %v430 = vpop.permute.xlu0 %429
        %v432 = vlaneseq
        %v433 = vshrl.u32 %v432, 7
        %v434 = vsub.s32 0, %v433
        %v435 = vrot.slane %v419, %v434
        %v436 = vsub.f32 %v425, %v435
        %v437 = vsub.f32 %v430, %v435
        %v438 = vmul.f32 %v436, %v436
        %v439 = vmul.f32 %v437, %v437
        %440 = vset.pattern.permute.xlu0 1
        %441 = vperm.xlu0 %440, %v420
        %v442 = vpop.permute.xlu0 %441
        %444 = vset.pattern.permute.xlu0 1
        %445 = vperm.xlu0 %444, %v421
        %v446 = vpop.permute.xlu0 %445
        %v448 = vlaneseq
        %v449 = vshrl.u32 %v448, 7
        %v450 = vsub.s32 1, %v449
        %v451 = vrot.slane %v419, %v450
        %v452 = vsub.f32 %v442, %v451
        %v453 = vsub.f32 %v446, %v451
        %v454 = vmul.f32 %v452, %v452
        %v455 = vmul.f32 %v453, %v453
        %v456 = vadd.f32 %v438, %v454
        %v457 = vadd.f32 %v439, %v455
        %458 = vset.pattern.permute.xlu0 2
        %459 = vperm.xlu0 %458, %v420
        %v460 = vpop.permute.xlu0 %459
        %462 = vset.pattern.permute.xlu0 2
        %463 = vperm.xlu0 %462, %v421
        %v464 = vpop.permute.xlu0 %463
        %v466 = vlaneseq
        %v467 = vshrl.u32 %v466, 7
        %v468 = vsub.s32 2, %v467
        %v469 = vrot.slane %v419, %v468
        %v470 = vsub.f32 %v460, %v469
        %v471 = vsub.f32 %v464, %v469
        %v472 = vmul.f32 %v470, %v470
        %v473 = vmul.f32 %v471, %v471
        %v474 = vadd.f32 %v456, %v472
        %v475 = vadd.f32 %v457, %v473
        %v476 = vlaneseq
        %v477 = vshrl.u32 %v476, 7
        %v478 = vadd.s32 %v477, 8
        %v481 = vand.u32 %v474, 4294967280
        %v482 = vand.u32 %v475, 4294967280
        %v483 = vor.u32 %v481, %v477
        %v484 = vor.u32 %v482, %v478
        %v487 = vmin.f32 %v483, %v484
        %v488 = vrot.slane %v487, 4
        %v489 = vmin.f32 %v487, %v488
        %v490 = vrot.slane %v489, 2
        %v491 = vmin.f32 %v489, %v490
        %v492 = vrot.slane %v491, 1
        %v493 = vmin.f32 %v491, %v492
        %v495 = vand.u32 %v493, 15
        %v496 = vand.u32 %v493, 4294967280
        %v498 = vadd.f32 %v496, 1e-08
        %v499 = vrcp.pop %v498
        %vm500 = vcmp.eq.s32.totalorder %v477, %v495
        %vm501 = vcmp.eq.s32.totalorder %v478, %v495
        %v502 = vsel %vm500, %v499, 0.0
        %v503 = vsel %vm501, %v499, 0.0
        %v504 = vsel %vm500, 3e+38, %v483
        %v505 = vsel %vm501, 3e+38, %v484
        %v506 = vmin.f32 %v504, %v505
        %v507 = vrot.slane %v506, 4
        %v508 = vmin.f32 %v506, %v507
        %v509 = vrot.slane %v508, 2
        %v510 = vmin.f32 %v508, %v509
        %v511 = vrot.slane %v510, 1
        %v512 = vmin.f32 %v510, %v511
        %v514 = vand.u32 %v512, 15
        %v515 = vand.u32 %v512, 4294967280
        %v517 = vadd.f32 %v515, 1e-08
        %v518 = vrcp.pop %v517
        %vm519 = vcmp.eq.s32.totalorder %v477, %v514
        %vm520 = vcmp.eq.s32.totalorder %v478, %v514
        %v521 = vsel %vm519, %v518, 0.0
        %v522 = vsel %vm520, %v518, 0.0
        %v523 = vadd.f32 %v502, %v521
        %v524 = vadd.f32 %v503, %v522
        %v525 = vadd.f32 %v499, %v518
        %v526 = vsel %vm519, 3e+38, %v504
        %v527 = vsel %vm520, 3e+38, %v505
        %v528 = vmin.f32 %v526, %v527
        %v529 = vrot.slane %v528, 4
        %v530 = vmin.f32 %v528, %v529
        %v531 = vrot.slane %v530, 2
        %v532 = vmin.f32 %v530, %v531
        %v533 = vrot.slane %v532, 1
        %v534 = vmin.f32 %v532, %v533
        %v536 = vand.u32 %v534, 15
        %v537 = vand.u32 %v534, 4294967280
        %v539 = vadd.f32 %v537, 1e-08
        %v540 = vrcp.pop %v539
        %vm541 = vcmp.eq.s32.totalorder %v477, %v536
        %vm542 = vcmp.eq.s32.totalorder %v478, %v536
        %v543 = vsel %vm541, %v540, 0.0
        %v544 = vsel %vm542, %v540, 0.0
        %v545 = vadd.f32 %v523, %v543
        %v546 = vadd.f32 %v524, %v544
        %v547 = vadd.f32 %v525, %v540
        %v548 = vld [vmem:[%s410] sm:$0xf]
        %v549 = vpack.c.bf16 %v546, %v545
        %vm550 = vcmask 130048
        %v552 = vsel %vm550, %v548, 0
        %554 = vmatprep.subr.bf16.mxu0 0
        %555 = vmatpush1.bf16.msra.mxu0 0
        %556 = vmatprep.subr.bf16.mxu0 0
        %557 = vmatpush1.bf16.msra.mxu0 0
        %558 = vmatprep.subr.bf16.mxu0 0
        %559 = vmatpush1.bf16.msra.mxu0 0
        %560 = vmatprep.subr.bf16.mxu0 0
        %561 = vmatpush1.bf16.msra.mxu0 0
        %562 = vmatprep.subr.bf16.mxu0 0
        %563 = vmatpush1.bf16.msra.mxu0 0
        %564 = vmatprep.subr.bf16.mxu0 0
        %565 = vmatpush1.bf16.msra.mxu0 0
        %566 = vmatprep.subr.bf16.mxu0 0
        %567 = vmatpush1.bf16.msra.mxu0 0
        %568 = vmatprep.subr.bf16.mxu0 0
        %569 = vmatpush1.bf16.msra.mxu0 %v549
        %570 = vmatprep.subr.bf16.mxu0 0
        %571 = vmatpush2.bf16.msra.mxu0 0
        %572 = vmatprep.subr.bf16.mxu0 0
        %573 = vmatpush2.bf16.msra.mxu0 0
        %574 = vmatprep.subr.bf16.mxu0 0
        %575 = vmatpush2.bf16.msra.mxu0 0
        %576 = vmatprep.subr.bf16.mxu0 0
        %577 = vmatpush2.bf16.msra.mxu0 0
        %578 = vmatprep.subr.bf16.mxu0 0
        %579 = vmatpush2.bf16.msra.mxu0 0
        %580 = vmatprep.subr.bf16.mxu0 0
        %581 = vmatpush2.bf16.msra.mxu0 0
        %582 = vmatprep.subr.bf16.mxu0 0
        %583 = vmatpush2.bf16.msra.mxu0 0
        %584 = vmatprep.subr.bf16.mxu0 0
        %585 = vmatpush2.bf16.msra.mxu0 0
        %586 = vmatprep.mubr.bf16.mxu0 0
        %587 = vmatmul.mubr.bf16.gmra.mxu0 %v552
        %v588 = vpop.f32.mrf.mxu0
        %v589 = vadd.f32 0.0, %v588
        %v590 = vpop.f32.mrf.mxu0
        %v591 = vpop.f32.mrf.mxu0
        %v592 = vpop.f32.mrf.mxu0
        %593 = vdwg.mxu0
        %v594 = vrcp.pop %v547
        %v595 = vmul.f32 %v589, %v594
        %v596 = vld [vmem:[%s4] sm:$0xf]
        %v597 = vld [vmem:[%s4 + $0x4] sm:$0xf]
        %v598 = vld [vmem:[%s4 + $0x8] sm:$0xf]
        %v599 = vld [vmem:[%s4 + $0xc] sm:$0xf]
        %v600 = vld [vmem:[%s5] sm:$0xf]
        %v601 = vld [vmem:[%s5 + $0x4] sm:$0xf]
        %v602 = vld [vmem:[%s5 + $0x8] sm:$0xf]
        %v603 = vld [vmem:[%s5 + $0xc] sm:$0xf]
        %v604 = vld [vmem:[%s6] sm:$0xff]
        %v605 = vld [vmem:[%s6 + $0x8] sm:$0xff]
        %v606 = vld [vmem:[%s6 + $0x10] sm:$0xff]
        %v607 = vld [vmem:[%s6 + $0x18] sm:$0xff]
        %v608 = vld [vmem:[%s417] sm:$0xf]
        %v609 = vpack.c.bf16 %v608, %v608
        %v610 = vpack.c.bf16 %v595, %v595
        %v615 = vunpack.c.l.b16 %v600
        %v616 = vunpack.c.l.b16 %v601
        %v617 = vunpack.c.l.b16 %v602
        %v618 = vunpack.c.l.b16 %v603
        %v619 = vpack.c.b16 %v616, %v615
        %v620 = vpack.c.b16 %v618, %v617
        %vm621 = vcmask 64512
        %v623 = vsel %vm621, %v619, 0
        %v626 = vsel %vm621, %v620, 0
        %vm628 = vcmask 1043456
        %v630 = vsel %vm628, %v610, 0
        %632 = vmatprep.subr.bf16.mxu0 0
        %633 = vmatpush1.bf16.msra.mxu0 0
        %634 = vmatprep.subr.bf16.mxu0 0
        %635 = vmatpush1.bf16.msra.mxu0 0
        %636 = vmatprep.subr.bf16.mxu0 0
        %637 = vmatpush1.bf16.msra.mxu0 0
        %638 = vmatprep.subr.bf16.mxu0 0
        %639 = vmatpush1.bf16.msra.mxu0 0
        %640 = vmatprep.subr.bf16.mxu0 0
        %641 = vmatpush1.bf16.msra.mxu0 0
        %642 = vmatprep.subr.bf16.mxu0 0
        %643 = vmatpush1.bf16.msra.mxu0 0
        %644 = vmatprep.subr.bf16.mxu0 0
        %645 = vmatpush1.bf16.msra.mxu0 0
        %646 = vmatprep.subr.bf16.mxu0 0
        %647 = vmatpush1.bf16.msra.mxu0 %v630
        %648 = vmatprep.subr.bf16.mxu0 0
        %649 = vmatpush2.bf16.msra.mxu0 0
        %650 = vmatprep.subr.bf16.mxu0 0
        %651 = vmatpush2.bf16.msra.mxu0 0
        %652 = vmatprep.subr.bf16.mxu0 0
        %653 = vmatpush2.bf16.msra.mxu0 0
        %654 = vmatprep.subr.bf16.mxu0 0
        %655 = vmatpush2.bf16.msra.mxu0 0
        %656 = vmatprep.subr.bf16.mxu0 0
        %657 = vmatpush2.bf16.msra.mxu0 0
        %658 = vmatprep.subr.bf16.mxu0 0
        %659 = vmatpush2.bf16.msra.mxu0 0
        %660 = vmatprep.subr.bf16.mxu0 0
        %661 = vmatpush2.bf16.msra.mxu0 0
        %662 = vmatprep.subr.bf16.mxu0 0
        %663 = vmatpush2.bf16.msra.mxu0 0
        %664 = vmatprep.mubr.bf16.mxu0 0
        %665 = vmatmul.mubr.bf16.gmra.mxu0 %v623
        %v666 = vpop.f32.mrf.mxu0
        %v667 = vadd.f32 0.0, %v666
        %v668 = vpop.f32.mrf.mxu0
        %v669 = vpop.f32.mrf.mxu0
        %v670 = vadd.f32 0.0, %v669
        %v671 = vpop.f32.mrf.mxu0
        %672 = vmatprep.mubr.bf16.mxu0 0
        %673 = vmatmul.mubr.bf16.gmra.mxu0 %v626
        %v674 = vpop.f32.mrf.mxu0
        %v675 = vadd.f32 0.0, %v674
        %v676 = vpop.f32.mrf.mxu0
        %v677 = vpop.f32.mrf.mxu0
        %v678 = vadd.f32 0.0, %v677
        %v679 = vpop.f32.mrf.mxu0
        %680 = vdwg.mxu0
        %v685 = vunpack.c.l.b16 %v596
        %v686 = vunpack.c.l.b16 %v597
        %v687 = vunpack.c.l.b16 %v598
        %v688 = vunpack.c.l.b16 %v599
        %v689 = vpack.c.b16 %v686, %v685
        %v690 = vpack.c.b16 %v688, %v687
        %vm691 = vcmask 31744
        %v693 = vsel %vm691, %v689, 0
        %v696 = vsel %vm691, %v690, 0
        %vm698 = vcmask 1041408
        %v700 = vsel %vm698, %v609, 0
        %702 = vmatprep.subr.bf16.mxu0 0
        %703 = vmatpush1.bf16.msra.mxu0 0
        %704 = vmatprep.subr.bf16.mxu0 0
        %705 = vmatpush1.bf16.msra.mxu0 0
        %706 = vmatprep.subr.bf16.mxu0 0
        %707 = vmatpush1.bf16.msra.mxu0 0
        %708 = vmatprep.subr.bf16.mxu0 0
        %709 = vmatpush1.bf16.msra.mxu0 0
        %710 = vmatprep.subr.bf16.mxu0 0
        %711 = vmatpush1.bf16.msra.mxu0 0
        %712 = vmatprep.subr.bf16.mxu0 0
        %713 = vmatpush1.bf16.msra.mxu0 0
        %714 = vmatprep.subr.bf16.mxu0 0
        %715 = vmatpush1.bf16.msra.mxu0 0
        %716 = vmatprep.subr.bf16.mxu0 0
        %717 = vmatpush1.bf16.msra.mxu0 %v700
        %718 = vmatprep.subr.bf16.mxu0 0
        %719 = vmatpush2.bf16.msra.mxu0 0
        %720 = vmatprep.subr.bf16.mxu0 0
        %721 = vmatpush2.bf16.msra.mxu0 0
        %722 = vmatprep.subr.bf16.mxu0 0
        %723 = vmatpush2.bf16.msra.mxu0 0
        %724 = vmatprep.subr.bf16.mxu0 0
        %725 = vmatpush2.bf16.msra.mxu0 0
        %726 = vmatprep.subr.bf16.mxu0 0
        %727 = vmatpush2.bf16.msra.mxu0 0
        %728 = vmatprep.subr.bf16.mxu0 0
        %729 = vmatpush2.bf16.msra.mxu0 0
        %730 = vmatprep.subr.bf16.mxu0 0
        %731 = vmatpush2.bf16.msra.mxu0 0
        %732 = vmatprep.subr.bf16.mxu0 0
        %733 = vmatpush2.bf16.msra.mxu0 0
        %734 = vmatprep.mubr.bf16.mxu0 0
        %735 = vmatmul.mubr.bf16.gmra.mxu0 %v693
        %v736 = vpop.f32.mrf.mxu0
        %v737 = vadd.f32 %v667, %v736
        %v738 = vpop.f32.mrf.mxu0
        %v739 = vpop.f32.mrf.mxu0
        %v740 = vadd.f32 %v670, %v739
        %v741 = vpop.f32.mrf.mxu0
        %742 = vmatprep.mubr.bf16.mxu0 0
        %743 = vmatmul.mubr.bf16.gmra.mxu0 %v696
        %v744 = vpop.f32.mrf.mxu0
        %v745 = vadd.f32 %v675, %v744
        %v746 = vpop.f32.mrf.mxu0
        %v747 = vpop.f32.mrf.mxu0
        %v748 = vadd.f32 %v678, %v747
        %v749 = vpop.f32.mrf.mxu0
        %750 = vdwg.mxu0
        %752 = vset.pattern.permute.xlu0 0
        %753 = vperm.xlu0 %752, %v604
        %v754 = vpop.permute.xlu0 %753
        %757 = vset.pattern.permute.xlu0 0
        %758 = vperm.xlu0 %757, %v605
        %v759 = vpop.permute.xlu0 %758
        %762 = vset.pattern.permute.xlu0 0
        %763 = vperm.xlu0 %762, %v606
        %v764 = vpop.permute.xlu0 %763
        %767 = vset.pattern.permute.xlu0 0
        %768 = vperm.xlu0 %767, %v607
        %v769 = vpop.permute.xlu0 %768
        %v771 = vadd.f32 %v737, %v754
        %v772 = vadd.f32 %v740, %v759
        %v773 = vadd.f32 %v745, %v764
        %v774 = vadd.f32 %v748, %v769
        %v775 = vmax.f32 %v771, 0.0
        %v776 = vmax.f32 %v772, 0.0
        %v777 = vmax.f32 %v773, 0.0
        %v778 = vmax.f32 %v774, 0.0
        %v779 = vld [vmem:[%s7] sm:$0xf]
        %v780 = vld [vmem:[%s7 + $0x4] sm:$0xf]
        %v781 = vld [vmem:[%s8] sm:$0xff]
        %v782 = vld [vmem:[%s8 + $0x8] sm:$0xff]
        %v783 = vpack.c.bf16 %v776, %v775
        %v784 = vpack.c.bf16 %v778, %v777
        %786 = vset.pattern.permute.xlu0 0
        %787 = vperm.xlu0 %786, %v781
        %v788 = vpop.permute.xlu0 %787
        %791 = vset.pattern.permute.xlu0 0
        %792 = vperm.xlu0 %791, %v782
        %v793 = vpop.permute.xlu0 %792
        %v797 = vunpack.c.l.b16 %v779
        %v798 = vunpack.c.l.b16 %v780
        %v799 = vpack.c.b16 %v798, %v797
        %vm800 = vcmask 261120
        %v802 = vsel %vm800, %v799, 0
        %804 = vmatprep.subr.bf16.mxu0 0
        %805 = vmatpush1.bf16.msra.mxu0 0
        %806 = vmatprep.subr.bf16.mxu0 0
        %807 = vmatpush1.bf16.msra.mxu0 0
        %808 = vmatprep.subr.bf16.mxu0 0
        %809 = vmatpush1.bf16.msra.mxu0 0
        %810 = vmatprep.subr.bf16.mxu0 0
        %811 = vmatpush1.bf16.msra.mxu0 0
        %812 = vmatprep.subr.bf16.mxu0 0
        %813 = vmatpush1.bf16.msra.mxu0 0
        %814 = vmatprep.subr.bf16.mxu0 0
        %815 = vmatpush1.bf16.msra.mxu0 0
        %816 = vmatprep.subr.bf16.mxu0 0
        %817 = vmatpush1.bf16.msra.mxu0 %v784
        %818 = vmatprep.subr.bf16.mxu0 0
        %819 = vmatpush1.bf16.msra.mxu0 %v783
        %820 = vmatprep.subr.bf16.mxu0 0
        %821 = vmatpush2.bf16.msra.mxu0 0
        %822 = vmatprep.subr.bf16.mxu0 0
        %823 = vmatpush2.bf16.msra.mxu0 0
        %824 = vmatprep.subr.bf16.mxu0 0
        %825 = vmatpush2.bf16.msra.mxu0 0
        %826 = vmatprep.subr.bf16.mxu0 0
        %827 = vmatpush2.bf16.msra.mxu0 0
        %828 = vmatprep.subr.bf16.mxu0 0
        %829 = vmatpush2.bf16.msra.mxu0 0
        %830 = vmatprep.subr.bf16.mxu0 0
        %831 = vmatpush2.bf16.msra.mxu0 0
        %832 = vmatprep.subr.bf16.mxu0 0
        %833 = vmatpush2.bf16.msra.mxu0 0
        %834 = vmatprep.subr.bf16.mxu0 0
        %835 = vmatpush2.bf16.msra.mxu0 0
        %836 = vmatprep.mubr.bf16.mxu0 0
        %837 = vmatmul.mubr.bf16.gmra.mxu0 %v802
        %v838 = vpop.f32.mrf.mxu0
        %v839 = vadd.f32 %v788, %v838
        %v840 = vpop.f32.mrf.mxu0
        %v841 = vpop.f32.mrf.mxu0
        %v842 = vadd.f32 %v793, %v841
        %v843 = vpop.f32.mrf.mxu0
        %844 = vdwg.mxu0
        %v845 = vmax.f32 %v839, 0.0
        %v846 = vmax.f32 %v842, 0.0
        %847 = vst [vmem:[%s394] sm:$0xff] %v845
        %848 = vst [vmem:[%s394 + $0x8] sm:$0xff] %v846
        %s849 = sand.u32 %s258, 1
        %s850 = scalar_lea.sflag [#allocation3], %s849
        %s851 = sand.u32 %s258, 1
        %s852 = smul.addr %s851, 16
        %s853 = scalar_lea.vmem [#allocation2], %s852
        // Predicated region
        $region57: #{tpu_custom_call.1} parent=55 // pred_check
          %p854 = pneg %p268
        $region58: #{tpu_custom_call.1} parent=55 // pred_check_branch
          %856 = sbr.rel (%p854) target = $region60
        $region59: #{tpu_custom_call.1} parent=55 // pred_region
          %s858 = ssub.s32 256, 256
          %859 = vsyncadd %s850, %s858
          %s860 = smul.addr %s27, 2
          %s861 = sadd.s32 %s28, %s860
          %s862 = smul.addr %s861, 128
          %s863 = scalar_lea.hbm %s9, %s862
          %s864 = sshll.u32 %s853, 4
          %s865 = int_to_ptr.vmem [resolvable:$true] %s864
          %870 = dma.vmem_to_hbm [thread:$0]  %s865, 256, %s863, %s850, 128, 128, 8
        $region60: #{tpu_custom_call.1} parent=55 // pred_fallthru
          _
      $region56: #{tpu_custom_call.1} parent=5 // pred_fallthru
        _
      %p871 = scmp.le.s32.totalorder 2, %s18
      // Predicated region
      $region61: #{tpu_custom_call.1} parent=5 // pred_check
        %p872 = pneg %p871
      $region62: #{tpu_custom_call.1} parent=5 // pred_check_branch
        %874 = sbr.rel (%p872) target = $region64
      $region63: #{tpu_custom_call.1} parent=5 // pred_region
        %s875 = ssub.s32 %s18, 2
        // Predicated region
        $region65: #{tpu_custom_call.1} parent=63 // pred_check
          %p876 = pneg %p274
        $region66: #{tpu_custom_call.1} parent=63 // pred_check_branch
          %878 = sbr.rel (%p876) target = $region68
        $region67: #{tpu_custom_call.1} parent=63 // pred_region
          %s879 = sand.u32 %s259, 1
          %s880 = scalar_lea.sflag [#allocation3], %s879
          %s881 = sand.u32 %s259, 1
          %s882 = smul.addr %s881, 16
          %s883 = scalar_lea.vmem [#allocation2], %s882
          %884 = dma.done %s880, 256
        $region68: #{tpu_custom_call.1} parent=63 // pred_fallthru
          _
      $region64: #{tpu_custom_call.1} parent=5 // pred_fallthru
        _
    $region6: #{tpu_custom_call.1} parent=1 // loop_footer
      %s22 = sadd.s32 1, %s18
    $region7: #{tpu_custom_call.1} parent=1 // loop_footer_branch
      %17 = sbr.rel target = $region3
    $region8: #{tpu_custom_call.1} parent=1 // loop_exit
      _
    %885 = vsyncpa [#allocation3], 1
    %s886 = scalar_lea.sflag [#allocation3], 1
    %887 = vsyncpa %s886, 1

</llo_original>
